<compile_context>
chip_gen: v7x
topology: tpu7x:2x2x1
jax: 0.10.0
libtpu: 0.0.40
codegen_flags: <defaults>
</compile_context>

<pallas_src>
import numpy as np
import jax
import jax.numpy as jnp
from jax.experimental import pallas as pl
from jax.experimental.pallas import tpu as pltpu

NPOSE = 24 * 6                    # 144
STATE_DIM = NPOSE + 10 + 3        # 157
STATE_PAD = 256                   # lane-padded state width
FEAT_DIM = 512 * 4                # 2048
HIDDEN = 1024
N_ITER = 3
VMEM_LIMIT = 32 * 1024 * 1024     # headroom for B up to ~2K (no grid)

# standard SMPL kinematic tree (24 joints)
SMPL_PARENTS = [-1, 0, 0, 0, 1, 2, 3, 4, 5, 6, 7, 8, 9, 9, 9, 12, 13, 14,
                16, 17, 18, 19, 20, 21]


# --------------------------------------------------------------------------
# Single fused kernel: out = x @ M + const   (folded 3-iteration refine)
# --------------------------------------------------------------------------
def _refine_fold_kernel(x_ref, m_ref, c_ref, o_ref):
    x_bf = x_ref[...].astype(jnp.bfloat16)           # cast in-kernel
    o_ref[...] = (jnp.dot(x_bf, m_ref[...],
                          preferred_element_type=jnp.float32)
                  + c_ref[...])                       # (1,256) bias broadcast


def iter_refine_pallas(x, params):
    B = x.shape[0]
    # Whole-array VMEM residency: ~1 MiB folded weight + B*8 KiB activations.
    # TODO(synk): add a 'parallel' batch grid axis before scaling B past ~2K
    #             (whole-array blocks would then exceed the 32 MiB limit).
    assert B <= 2048, "add a batch grid axis before scaling B"
    Bp = ((B + 7) // 8) * 8
    x_in = x if Bp == B else jnp.pad(x, ((0, Bp - B), (0, 0)))

    vmem = pl.BlockSpec(memory_space=pltpu.MemorySpace.VMEM)
    out = pl.pallas_call(
        _refine_fold_kernel,
        out_shape=jax.ShapeDtypeStruct((Bp, STATE_PAD), jnp.float32),
        in_specs=[vmem, vmem, vmem],
        out_specs=vmem,
        compiler_params=pltpu.CompilerParams(vmem_limit_bytes=VMEM_LIMIT),
    )(x_in, params["M"], params["const"])

    state = out[:B]
    pred_pose = state[:, :NPOSE]
    pred_shape = state[:, NPOSE:NPOSE + 10]
    pred_cam = state[:, NPOSE + 10:STATE_DIM]
    return pred_pose, pred_shape, pred_cam


# --------------------------------------------------------------------------
# Pure-JAX f32 reference of the unfolded iterative refine (validation only)
# --------------------------------------------------------------------------
def iter_refine_reference(x, raw, n_iter=N_ITER):
    B = x.shape[0]
    state = jnp.broadcast_to(
        jnp.concatenate(
            [raw["init_pose"], raw["init_shape"], raw["init_cam"]])[None, :],
        (B, STATE_DIM))
    for _ in range(n_iter):
        xc = jnp.concatenate([x, state], axis=1)
        h = xc @ raw["W1"] + raw["b1"]
        h = h @ raw["W2"] + raw["b2"]
        delta = jnp.concatenate([h @ raw["Wp"] + raw["bp"],
                                 h @ raw["Wsh"] + raw["bsh"],
                                 h @ raw["Wc"] + raw["bc"]], axis=1)
        state = state + delta
    return state[:, :NPOSE], state[:, NPOSE:NPOSE + 10], state[:, NPOSE + 10:]


# --------------------------------------------------------------------------
# projection(): plain JAX (lane-sparse N=24; XLA fuses this for free)
# --------------------------------------------------------------------------
def projection_jax(pred_joints, pred_cam):
    # pred_joints: (B, N, 3), pred_cam: (B, 3) = [s, tx, ty]
    s = pred_cam[:, 0]
    tz = 2.0 * 5000.0 / (224.0 * s + 1e-9)
    trans = jnp.stack([pred_cam[:, 1], pred_cam[:, 2], tz], axis=-1)  # (B,3)
    pts = pred_joints + trans[:, None, :]
    proj = 5000.0 * pts[..., :2] / pts[..., 2:3]      # focal=5000, center=0
    return proj / (224.0 / 2.0)


# --------------------------------------------------------------------------
# Plain-JAX glue: rotation conversions
# --------------------------------------------------------------------------
def rot6d_to_rotmat(pose6d):
    """convert_orth_6d_to_mat (Zhou et al. ortho6d): (B,144)->(B*24,3,3)."""
    x = pose6d.reshape(-1, 6)
    a1 = x[:, 0:3]
    a2 = x[:, 3:6]
    b1 = a1 / (jnp.linalg.norm(a1, axis=-1, keepdims=True) + 1e-8)
    b3 = jnp.cross(b1, a2)
    b3 = b3 / (jnp.linalg.norm(b3, axis=-1, keepdims=True) + 1e-8)
    b2 = jnp.cross(b3, b1)
    return jnp.stack([b1, b2, b3], axis=-1)             # columns [x, y, z]


def rotation_matrix_to_quaternion(R, eps=1e-6):
    """torchgeometry/kornia convention: works on R^T, returns (w,x,y,z)."""
    rt = jnp.transpose(R, (0, 2, 1))
    m00, m01, m02 = rt[:, 0, 0], rt[:, 0, 1], rt[:, 0, 2]
    m10, m11, m12 = rt[:, 1, 0], rt[:, 1, 1], rt[:, 1, 2]
    m20, m21, m22 = rt[:, 2, 0], rt[:, 2, 1], rt[:, 2, 2]

    mask_d2 = m22 < eps
    mask_d0_d1 = m00 > m11
    mask_d0_nd1 = m00 < -m11

    t0 = 1.0 + m00 - m11 - m22
    q0 = jnp.stack([m12 - m21, t0, m01 + m10, m20 + m02], axis=-1)
    t1 = 1.0 - m00 + m11 - m22
    q1 = jnp.stack([m20 - m02, m01 + m10, t1, m12 + m21], axis=-1)
    t2 = 1.0 - m00 - m11 + m22
    q2 = jnp.stack([m01 - m10, m20 + m02, m12 + m21, t2], axis=-1)
    t3 = 1.0 + m00 + m11 + m22
    q3 = jnp.stack([t3, m12 - m21, m20 - m02, m01 - m10], axis=-1)

    c0 = mask_d2 & mask_d0_d1
    c1 = mask_d2 & (~mask_d0_d1)
    c2 = (~mask_d2) & mask_d0_nd1

    t = jnp.where(c0, t0, jnp.where(c1, t1, jnp.where(c2, t2, t3)))
    q = jnp.where(c0[:, None], q0,
        jnp.where(c1[:, None], q1,
        jnp.where(c2[:, None], q2, q3)))
    return q * (0.5 / jnp.sqrt(jnp.maximum(t, eps)))[:, None]


def quaternion_to_angle_axis(q):
    q1, q2, q3 = q[:, 1], q[:, 2], q[:, 3]
    sin_sq = q1 * q1 + q2 * q2 + q3 * q3
    sin_theta = jnp.sqrt(sin_sq)
    cos_theta = q[:, 0]
    two_theta = 2.0 * jnp.where(cos_theta < 0.0,
                                jnp.arctan2(-sin_theta, -cos_theta),
                                jnp.arctan2(sin_theta, cos_theta))
    k_pos = two_theta / jnp.maximum(sin_theta, 1e-12)
    k = jnp.where(sin_sq > 1e-12, k_pos, 2.0)
    return jnp.stack([q1 * k, q2 * k, q3 * k], axis=-1)


def rotmat_to_angle_axis(R):
    """rotation_matrix_to_angle_axis (quaternion path, robust near pi)."""
    aa = quaternion_to_angle_axis(rotation_matrix_to_quaternion(R))
    return jnp.nan_to_num(aa)


# --------------------------------------------------------------------------
# Synthetic SMPL (pose2rot=False path) with LBS
# --------------------------------------------------------------------------
def synthetic_smpl(smpl_params, betas, rotmats):
    """SMPL forward with LBS.

    # TODO(synk): the real SMPL body model requires an external .pkl model
    # file (template, blendshapes, J_regressor, skinning weights, joint
    # mapper).  Deterministic synthetic parameters with the same LBS math are
    # used instead; joints output = the 24 posed kinematic joints.
    """
    v_template = smpl_params["v_template"]   # (V, 3)
    shapedirs = smpl_params["shapedirs"]     # (V, 3, 10)
    posedirs = smpl_params["posedirs"]       # (207, V*3)
    J_reg = smpl_params["J_regressor"]       # (24, V)
    W = smpl_params["lbs_weights"]           # (V, 24)
    B = betas.shape[0]
    V = v_template.shape[0]

    v_shaped = v_template[None] + jnp.einsum("bl,vkl->bvk", betas, shapedirs)
    J = jnp.einsum("jv,bvk->bjk", J_reg, v_shaped)                 # (B, 24, 3)

    ident = jnp.eye(3, dtype=rotmats.dtype)
    pose_feature = (rotmats[:, 1:] - ident).reshape(B, -1)         # (B, 207)
    v_posed = v_shaped + (pose_feature @ posedirs).reshape(B, V, 3)

    parents = SMPL_PARENTS
    parents_np = np.asarray(parents[1:])
    rel_J = J.at[:, 1:].set(J[:, 1:] - J[:, parents_np])
    T_local = jnp.concatenate([rotmats, rel_J[..., None]], axis=-1)  # (B,24,3,4)
    bottom = jnp.broadcast_to(jnp.array([0.0, 0.0, 0.0, 1.0], jnp.float32),
                              (B, 24, 1, 4))
    T_local = jnp.concatenate([T_local, bottom], axis=-2)            # (B,24,4,4)

    chain = [T_local[:, 0]]
    for i in range(1, 24):
        chain.append(chain[parents[i]] @ T_local[:, i])
    A = jnp.stack(chain, axis=1)                                     # (B,24,4,4)
    posed_joints = A[:, :, :3, 3]                                    # (B,24,3)

    J_homo = jnp.concatenate([J, jnp.zeros((B, 24, 1))], axis=-1)[..., None]
    A_rel = A - jnp.concatenate(
        [jnp.zeros((B, 24, 4, 3)), A @ J_homo], axis=-1)

    T = jnp.einsum("vj,bjmn->bvmn", W, A_rel)                        # (B,V,4,4)
    v_homo = jnp.concatenate([v_posed, jnp.ones((B, V, 1))], axis=-1)
    verts = jnp.einsum("bvmn,bvn->bvm", T, v_homo)[..., :3]
    return verts, posed_joints


# --------------------------------------------------------------------------
# Deterministic parameter construction (synthetic weights, no checkpoint)
# with the full offline fold of the eval-mode affine refine.
# --------------------------------------------------------------------------
def make_params(key, num_verts=432):
    ks = jax.random.split(key, 16)

    def dense(k, fan_in, fan_out, scale):
        kw, kb = jax.random.split(k)
        Wm = jax.random.normal(kw, (fan_in, fan_out), jnp.float32) * scale
        b = jax.random.normal(kb, (1, fan_out), jnp.float32) * 0.01
        return Wm, b

    # fc1: Linear(2048 + 157 -> 1024)
    W1, b1 = dense(ks[0], FEAT_DIM + STATE_DIM, HIDDEN,
                   1.0 / np.sqrt(FEAT_DIM + STATE_DIM))
    # fc2: Linear(1024 -> 1024)
    W2, b2 = dense(ks[1], HIDDEN, HIDDEN, 1.0 / np.sqrt(HIDDEN))
    # decoders (xavier gain 0.01 -> tiny weights)
    Wp, bp = dense(ks[2], HIDDEN, NPOSE, 1e-3)
    Wsh, bsh = dense(ks[3], HIDDEN, 10, 1e-3)
    Wc, bc = dense(ks[4], HIDDEN, 3, 1e-3)

    # mean params (stand-in for smpl_mean_params npz): identity-ish 6D pose
    init_pose = jnp.tile(jnp.array([1., 0., 0., 0., 1., 0.], jnp.float32), 24)
    init_shape = jnp.zeros((10,), jnp.float32)
    init_cam = jnp.array([0.9, 0.0, 0.0], jnp.float32)

    # ---- full offline fold (all in f32; exact for eval mode: dropout =
    #      identity, fixed n_iter=3, default mean-params init) --------------
    # TODO(synk): custom init_pose/init_shape/init_cam or n_iter != 3 would
    #             require the unfolded iterative path.
    W1x = W1[:FEAT_DIM]                                  # (2048, 1024)
    W1s = W1[FEAT_DIM:]                                  # (157, 1024)
    Wdec = jnp.concatenate([Wp, Wsh, Wc], axis=1)        # (1024, 157)
    bdec = jnp.concatenate([bp, bsh, bc], axis=1)        # (1, 157)
    W2dec = W2 @ Wdec                                    # (1024, 157)
    bias_eff = b1 @ W2dec + b2 @ Wdec + bdec             # (1, 157)

    eye = jnp.eye(STATE_DIM, dtype=jnp.float32)
    A = eye + W1s @ W2dec                                # (157, 157)
    A2 = A @ A
    A3 = A2 @ A
    S = A2 + A + eye                                     # A^2 + A + I
    M = W1x @ (W2dec @ S)                                # (2048, 157)
    s0 = jnp.concatenate([init_pose, init_shape, init_cam])[None, :]  # (1,157)
    const = s0 @ A3 + bias_eff @ S                       # (1, 157)

    # lane-pad 157 -> 256; only M is cast to bf16 (fold stays f32)
    M_pad = jnp.zeros((FEAT_DIM, STATE_PAD), jnp.float32)
    M_pad = M_pad.at[:, :STATE_DIM].set(M)
    const_pad = jnp.zeros((1, STATE_PAD), jnp.float32)
    const_pad = const_pad.at[:, :STATE_DIM].set(const)

    regressor = dict(M=M_pad.astype(jnp.bfloat16), const=const_pad)

    raw = dict(W1=W1, b1=b1, W2=W2, b2=b2, Wp=Wp, bp=bp, Wsh=Wsh, bsh=bsh,
               Wc=Wc, bc=bc, init_pose=init_pose, init_shape=init_shape,
               init_cam=init_cam)

    V = num_verts
    smpl = dict(
        v_template=jax.random.normal(ks[5], (V, 3), jnp.float32) * 0.2,
        shapedirs=jax.random.normal(ks[6], (V, 3, 10), jnp.float32) * 0.01,
        posedirs=jax.random.normal(ks[7], (207, V * 3), jnp.float32) * 1e-3,
        J_regressor=jax.nn.softmax(
            jax.random.normal(ks[8], (24, V), jnp.float32), axis=-1),
        lbs_weights=jax.nn.softmax(
            2.0 * jax.random.normal(ks[9], (V, 24), jnp.float32), axis=-1),
    )
    return regressor, smpl, raw


# --------------------------------------------------------------------------
# Regressor.forward
# --------------------------------------------------------------------------
def regressor_forward(x, reg_params, smpl_params):
    B = x.shape[0]
    # iter_refine (single fused Pallas kernel, fully folded n_iter=3)
    pred_pose, pred_shape, pred_cam = iter_refine_pallas(x, reg_params)
    # convert_orth_6d_to_mat
    pred_rotmat = rot6d_to_rotmat(pred_pose).reshape(B, 24, 3, 3)
    # SMPL (synthetic, see TODO inside)
    pred_vertices, pred_joints = synthetic_smpl(
        smpl_params, pred_shape, pred_rotmat)
    # J_regressor is None in this demo, so the H36M_TO_J14 branch is skipped.
    # projection (plain JAX; lane-sparse -> faster than a Pallas kernel)
    pred_keypoints_2d = projection_jax(pred_joints, pred_cam)
    # theta = [cam(3), pose_aa(72), shape(10)]
    pose_aa = rotmat_to_angle_axis(pred_rotmat.reshape(-1, 3, 3)).reshape(B, 72)
    theta = jnp.concatenate([pred_cam, pose_aa, pred_shape], axis=1)
    return [{
        "theta": theta,
        "verts": pred_vertices,
        "kp_2d": pred_keypoints_2d,
        "kp_3d": pred_joints,
        "rotmat": pred_rotmat,
    }]


if __name__ == "__main__":
    key = jax.random.PRNGKey(0)
    k_in, k_par = jax.random.split(key)

    B = 2
    x = jax.random.normal(k_in, (B, FEAT_DIM), jnp.float32)   # (2, 2048)

    reg_params, smpl_params, raw_params = make_params(k_par)

    fwd = jax.jit(regressor_forward)
    out = fwd(x, reg_params, smpl_params)
    jax.block_until_ready(out)

    o = out[0]
    assert o["theta"].shape == (B, 85)
    assert o["rotmat"].shape == (B, 24, 3, 3)
    assert o["kp_2d"].shape == (B, 24, 2)
    assert o["kp_3d"].shape == (B, 24, 3)
    assert all(bool(jnp.all(jnp.isfinite(v))) for v in o.values())

    # Validate the folded Pallas refine against the unfolded f32 reference
    # (loose tolerance: only difference is bf16 rounding of M and of x).
    pp, ps, pc = iter_refine_pallas(x, reg_params)
    rp, rs, rc = iter_refine_reference(x, raw_params)
    for got, ref in ((pp, rp), (ps, rs), (pc, rc)):
        err = float(jnp.max(jnp.abs(got - ref)))
        assert err < 5e-2, f"refine mismatch vs f32 reference: {err}"

    print("KERNEL_OK")
</pallas_src>

<mosaic_0001>
module attributes {stable_mosaic.version = 11 : i64} {
  func.func @_refine_fold_kernel(%arg0: memref<8x2048xf32, #tpu.memory_space<vmem>>, %arg1: memref<2048x256xbf16, #tpu.memory_space<vmem>>, %arg2: memref<1x256xf32, #tpu.memory_space<vmem>>, %arg3: memref<8x256xf32, #tpu.memory_space<vmem>>) attributes {dimension_semantics = [], scalar_prefetch = 0 : i64, scratch_operands = 0 : i64, tpu.core_type = #tpu.core_type<tc>} {
    %c0 = arith.constant 0 : index
    %c0_0 = arith.constant 0 : index
    %0 = vector.load %arg0[%c0, %c0_0] : memref<8x2048xf32, #tpu.memory_space<vmem>>, vector<8x2048xf32>
    %1 = arith.truncf %0 : vector<8x2048xf32> to vector<8x2048xbf16>
    %c0_1 = arith.constant 0 : index
    %c0_2 = arith.constant 0 : index
    %2 = vector.load %arg1[%c0_1, %c0_2] : memref<2048x256xbf16, #tpu.memory_space<vmem>>, vector<2048x256xbf16>
    %cst = arith.constant dense<0.000000e+00> : vector<8x256xf32>
    %3 = tpu.matmul %1, %2, %cst {dimension_numbers = #tpu.dot_dimension_numbers<[1], [0], [0], [1], [0, 0, 1, 1], [], []>} : vector<8x2048xbf16>, vector<2048x256xbf16>, vector<8x256xf32> -> vector<8x256xf32>
    %c0_3 = arith.constant 0 : index
    %c0_4 = arith.constant 0 : index
    %4 = vector.load %arg2[%c0_3, %c0_4] : memref<1x256xf32, #tpu.memory_space<vmem>>, vector<1x256xf32>
    %5 = vector.broadcast %4 : vector<1x256xf32> to vector<8x256xf32>
    %6 = arith.addf %3, %5 : vector<8x256xf32>
    %c0_5 = arith.constant 0 : index
    %c0_6 = arith.constant 0 : index
    %7 = vector.load %arg3[%c0_5, %c0_6] : memref<8x256xf32, #tpu.memory_space<vmem>>, vector<8x256xf32>
    tpu.vector_store %arg3[%c0_5, %c0_6], %6 {strides = array<i32>} : memref<8x256xf32, #tpu.memory_space<vmem>>, vector<8x256xf32>,
    return
  }
}

</mosaic_0001>

<llo_original>
// kernel: regressor_forward.1
$region0: #{regressor_forward.1}
  #allocation0 [shape = 'u32[]', space=smem, size = 0x4, offset = 0x4, fixed_abs, tag = 'smem constant byte address 0x4 - core index']
  #allocation1 [shape = 'u32[144,128]{1,0:T(1,128)}', space=vmem, size = 0x12000, scoped, tag = 'internal scratch']
  %s0 = inlined_call_operand.vmem [shape: f32[8,2048], index: 0, kind: input, shape index: {}]
  %s1 = inlined_call_operand.hbm [shape: bf16[2048,256], index: 1, kind: input, shape index: {}]
  %s2 = inlined_call_operand.hbm [shape: f32[1,256], index: 2, kind: input, shape index: {}]
  %s3 = inlined_call_operand.vmem [shape: f32[8,256], index: 3, kind: output, shape index: {}]
  %s4 = sld [smem:[#allocation0]]
  $region30: #{regressor_forward.1} parent=0
    _
  %s6 = ssub.s32 1, %s4
  %s7 = scalar_select 0, %s6, %s4
  $region1: #{regressor_forward.1} parent=0
    #allocation2 [shape = 'u8[1048576]{0}', space=vmem, size = 0x100000, scoped, tag = 'input window, operand 1, single buffered']
    #allocation3 [shape = 's32[1]{0}', space=sflag, size = 0x4, scoped, tag = 'scoped memory for regressor_forward.1']
    #allocation4 [shape = 'u8[1024]{0}', space=vmem, size = 0x400, scoped, tag = 'input window, operand 2, single buffered']
    #allocation5 [shape = 's32[1]{0}', space=sflag, size = 0x4, scoped, tag = 'scoped memory for regressor_forward.1']
    %8 = vsyncpa [#allocation3], 0
    %9 = vsyncpa [#allocation5], 0
    // Predicated region
    $region2: #{regressor_forward.1} parent=1 // pred_check
      _
    $region3: #{regressor_forward.1} parent=1 // pred_check_branch
      %11 = sbr.rel (0) target = $region5
    $region4: #{regressor_forward.1} parent=1 // pred_region
      _
    $region5: #{regressor_forward.1} parent=1 // pred_fallthru
      _
    // Predicated region
    $region6: #{regressor_forward.1} parent=1 // pred_check
      _
    $region7: #{regressor_forward.1} parent=1 // pred_check_branch
      %13 = sbr.rel (0) target = $region9
    $region8: #{regressor_forward.1} parent=1 // pred_region
      %s15 = ssub.s32 32768, 32768
      %16 = vsyncadd [#allocation3], %s15
      %s17 = sshll.u32 [#allocation2], 4
      %s18 = int_to_ptr.vmem [resolvable:$true] %s17
      %23 = dma.hbm_to_vmem [thread:$0]  %s1, 32768, %s18, [#allocation3], 128, 128, 8
    $region9: #{regressor_forward.1} parent=1 // pred_fallthru
      _
    // Predicated region
    $region10: #{regressor_forward.1} parent=1 // pred_check
      _
    $region11: #{regressor_forward.1} parent=1 // pred_check_branch
      %25 = sbr.rel (0) target = $region13
    $region12: #{regressor_forward.1} parent=1 // pred_region
      %s27 = ssub.s32 32, 32
      %28 = vsyncadd [#allocation5], %s27
      %s30 = sshll.u32 [#allocation4], 4
      %s31 = int_to_ptr.vmem [resolvable:$true] %s30
      %33 = dma.hbm_to_vmem [thread:$0]  %s2, 32, %s31, [#allocation5]
    $region13: #{regressor_forward.1} parent=1 // pred_fallthru
      _
    // Predicated region
    $region14: #{regressor_forward.1} parent=1 // pred_check
      _
    $region15: #{regressor_forward.1} parent=1 // pred_check_branch
      %35 = sbr.rel (0) target = $region17
    $region16: #{regressor_forward.1} parent=1 // pred_region
      %36 = dma.done [#allocation3], 32768
    $region17: #{regressor_forward.1} parent=1 // pred_fallthru
      _
    // Predicated region
    $region18: #{regressor_forward.1} parent=1 // pred_check
      _
    $region19: #{regressor_forward.1} parent=1 // pred_check_branch
      %38 = sbr.rel (0) target = $region21
    $region20: #{regressor_forward.1} parent=1 // pred_region
      %39 = dma.done [#allocation5], 32
    $region21: #{regressor_forward.1} parent=1 // pred_fallthru
      _
    %v40 = vld [vmem:[%s0] sm:$0xff]
    %v41 = vld [vmem:[%s0 + $0x8] sm:$0xff]
    %v42 = vld [vmem:[%s0 + $0x10] sm:$0xff]
    %v43 = vld [vmem:[%s0 + $0x18] sm:$0xff]
    %v44 = vld [vmem:[%s0 + $0x20] sm:$0xff]
    %v45 = vld [vmem:[%s0 + $0x28] sm:$0xff]
    %v46 = vld [vmem:[%s0 + $0x30] sm:$0xff]
    %v47 = vld [vmem:[%s0 + $0x38] sm:$0xff]
    %v48 = vld [vmem:[%s0 + $0x40] sm:$0xff]
    %v49 = vld [vmem:[%s0 + $0x48] sm:$0xff]
    %v50 = vld [vmem:[%s0 + $0x50] sm:$0xff]
    %v51 = vld [vmem:[%s0 + $0x58] sm:$0xff]
    %v52 = vld [vmem:[%s0 + $0x60] sm:$0xff]
    %v53 = vld [vmem:[%s0 + $0x68] sm:$0xff]
    %v54 = vld [vmem:[%s0 + $0x70] sm:$0xff]
    %v55 = vld [vmem:[%s0 + $0x78] sm:$0xff]
    %v56 = vpack.c.bf16 %v40, %v40
    %v57 = vpack.c.bf16 %v41, %v41
    %v58 = vpack.c.bf16 %v42, %v42
    %v59 = vpack.c.bf16 %v43, %v43
    %v60 = vpack.c.bf16 %v44, %v44
    %v61 = vpack.c.bf16 %v45, %v45
    %v62 = vpack.c.bf16 %v46, %v46
    %v63 = vpack.c.bf16 %v47, %v47
    %v64 = vpack.c.bf16 %v48, %v48
    %v65 = vpack.c.bf16 %v49, %v49
    %v66 = vpack.c.bf16 %v50, %v50
    %v67 = vpack.c.bf16 %v51, %v51
    %v68 = vpack.c.bf16 %v52, %v52
    %v69 = vpack.c.bf16 %v53, %v53
    %v70 = vpack.c.bf16 %v54, %v54
    %v71 = vpack.c.bf16 %v55, %v55
    %v72 = vld [vmem:[#allocation2] sm:$0xff]
    %v73 = vld [vmem:[#allocation2 + $0x8] sm:$0xff]
    %v74 = vld [vmem:[#allocation2 + $0x10] sm:$0xff]
    %v75 = vld [vmem:[#allocation2 + $0x18] sm:$0xff]
    %v76 = vld [vmem:[#allocation2 + $0x20] sm:$0xff]
    %v77 = vld [vmem:[#allocation2 + $0x28] sm:$0xff]
    %v78 = vld [vmem:[#allocation2 + $0x30] sm:$0xff]
    %v79 = vld [vmem:[#allocation2 + $0x38] sm:$0xff]
    %v80 = vld [vmem:[#allocation2 + $0x40] sm:$0xff]
    %v81 = vld [vmem:[#allocation2 + $0x48] sm:$0xff]
    %v82 = vld [vmem:[#allocation2 + $0x50] sm:$0xff]
    %v83 = vld [vmem:[#allocation2 + $0x58] sm:$0xff]
    %v84 = vld [vmem:[#allocation2 + $0x60] sm:$0xff]
    %v85 = vld [vmem:[#allocation2 + $0x68] sm:$0xff]
    %v86 = vld [vmem:[#allocation2 + $0x70] sm:$0xff]
    %v87 = vld [vmem:[#allocation2 + $0x78] sm:$0xff]
    %v88 = vld [vmem:[#allocation2 + $0x80] sm:$0xff]
    %v89 = vld [vmem:[#allocation2 + $0x88] sm:$0xff]
    %v90 = vld [vmem:[#allocation2 + $0x90] sm:$0xff]
    %v91 = vld [vmem:[#allocation2 + $0x98] sm:$0xff]
    %v92 = vld [vmem:[#allocation2 + $0xa0] sm:$0xff]
    %v93 = vld [vmem:[#allocation2 + $0xa8] sm:$0xff]
    %v94 = vld [vmem:[#allocation2 + $0xb0] sm:$0xff]
    %v95 = vld [vmem:[#allocation2 + $0xb8] sm:$0xff]
    %v96 = vld [vmem:[#allocation2 + $0xc0] sm:$0xff]
    %v97 = vld [vmem:[#allocation2 + $0xc8] sm:$0xff]
    %v98 = vld [vmem:[#allocation2 + $0xd0] sm:$0xff]
    %v99 = vld [vmem:[#allocation2 + $0xd8] sm:$0xff]
    %v100 = vld [vmem:[#allocation2 + $0xe0] sm:$0xff]
    %v101 = vld [vmem:[#allocation2 + $0xe8] sm:$0xff]
    %v102 = vld [vmem:[#allocation2 + $0xf0] sm:$0xff]
    %v103 = vld [vmem:[#allocation2 + $0xf8] sm:$0xff]
    %v104 = vld [vmem:[#allocation2 + $0x100] sm:$0xff]
    %v105 = vld [vmem:[#allocation2 + $0x108] sm:$0xff]
    %v106 = vld [vmem:[#allocation2 + $0x110] sm:$0xff]
    %v107 = vld [vmem:[#allocation2 + $0x118] sm:$0xff]
    %v108 = vld [vmem:[#allocation2 + $0x120] sm:$0xff]
    %v109 = vld [vmem:[#allocation2 + $0x128] sm:$0xff]
    %v110 = vld [vmem:[#allocation2 + $0x130] sm:$0xff]
    %v111 = vld [vmem:[#allocation2 + $0x138] sm:$0xff]
    %v112 = vld [vmem:[#allocation2 + $0x140] sm:$0xff]
    %v113 = vld [vmem:[#allocation2 + $0x148] sm:$0xff]
    %v114 = vld [vmem:[#allocation2 + $0x150] sm:$0xff]
    %v115 = vld [vmem:[#allocation2 + $0x158] sm:$0xff]
    %v116 = vld [vmem:[#allocation2 + $0x160] sm:$0xff]
    %v117 = vld [vmem:[#allocation2 + $0x168] sm:$0xff]
    %v118 = vld [vmem:[#allocation2 + $0x170] sm:$0xff]
    %v119 = vld [vmem:[#allocation2 + $0x178] sm:$0xff]
    %v120 = vld [vmem:[#allocation2 + $0x180] sm:$0xff]
    %v121 = vld [vmem:[#allocation2 + $0x188] sm:$0xff]
    %v122 = vld [vmem:[#allocation2 + $0x190] sm:$0xff]
    %v123 = vld [vmem:[#allocation2 + $0x198] sm:$0xff]
    %v124 = vld [vmem:[#allocation2 + $0x1a0] sm:$0xff]
    %v125 = vld [vmem:[#allocation2 + $0x1a8] sm:$0xff]
    %v126 = vld [vmem:[#allocation2 + $0x1b0] sm:$0xff]
    %v127 = vld [vmem:[#allocation2 + $0x1b8] sm:$0xff]
    %v128 = vld [vmem:[#allocation2 + $0x1c0] sm:$0xff]
    %v129 = vld [vmem:[#allocation2 + $0x1c8] sm:$0xff]
    %v130 = vld [vmem:[#allocation2 + $0x1d0] sm:$0xff]
    %v131 = vld [vmem:[#allocation2 + $0x1d8] sm:$0xff]
    %v132 = vld [vmem:[#allocation2 + $0x1e0] sm:$0xff]
    %v133 = vld [vmem:[#allocation2 + $0x1e8] sm:$0xff]
    %v134 = vld [vmem:[#allocation2 + $0x1f0] sm:$0xff]
    %v135 = vld [vmem:[#allocation2 + $0x1f8] sm:$0xff]
    %v136 = vld [vmem:[#allocation2 + $0x200] sm:$0xff]
    %v137 = vld [vmem:[#allocation2 + $0x208] sm:$0xff]
    %v138 = vld [vmem:[#allocation2 + $0x210] sm:$0xff]
    %v139 = vld [vmem:[#allocation2 + $0x218] sm:$0xff]
    %v140 = vld [vmem:[#allocation2 + $0x220] sm:$0xff]
    %v141 = vld [vmem:[#allocation2 + $0x228] sm:$0xff]
    %v142 = vld [vmem:[#allocation2 + $0x230] sm:$0xff]
    %v143 = vld [vmem:[#allocation2 + $0x238] sm:$0xff]
    %v144 = vld [vmem:[#allocation2 + $0x240] sm:$0xff]
    %v145 = vld [vmem:[#allocation2 + $0x248] sm:$0xff]
    %v146 = vld [vmem:[#allocation2 + $0x250] sm:$0xff]
    %v147 = vld [vmem:[#allocation2 + $0x258] sm:$0xff]
    %v148 = vld [vmem:[#allocation2 + $0x260] sm:$0xff]
    %v149 = vld [vmem:[#allocation2 + $0x268] sm:$0xff]
    %v150 = vld [vmem:[#allocation2 + $0x270] sm:$0xff]
    %v151 = vld [vmem:[#allocation2 + $0x278] sm:$0xff]
    %v152 = vld [vmem:[#allocation2 + $0x280] sm:$0xff]
    %v153 = vld [vmem:[#allocation2 + $0x288] sm:$0xff]
    %v154 = vld [vmem:[#allocation2 + $0x290] sm:$0xff]
    %v155 = vld [vmem:[#allocation2 + $0x298] sm:$0xff]
    %v156 = vld [vmem:[#allocation2 + $0x2a0] sm:$0xff]
    %v157 = vld [vmem:[#allocation2 + $0x2a8] sm:$0xff]
    %v158 = vld [vmem:[#allocation2 + $0x2b0] sm:$0xff]
    %v159 = vld [vmem:[#allocation2 + $0x2b8] sm:$0xff]
    %v160 = vld [vmem:[#allocation2 + $0x2c0] sm:$0xff]
    %v161 = vld [vmem:[#allocation2 + $0x2c8] sm:$0xff]
    %v162 = vld [vmem:[#allocation2 + $0x2d0] sm:$0xff]
    %v163 = vld [vmem:[#allocation2 + $0x2d8] sm:$0xff]
    %v164 = vld [vmem:[#allocation2 + $0x2e0] sm:$0xff]
    %v165 = vld [vmem:[#allocation2 + $0x2e8] sm:$0xff]
    %v166 = vld [vmem:[#allocation2 + $0x2f0] sm:$0xff]
    %v167 = vld [vmem:[#allocation2 + $0x2f8] sm:$0xff]
    %v168 = vld [vmem:[#allocation2 + $0x300] sm:$0xff]
    %v169 = vld [vmem:[#allocation2 + $0x308] sm:$0xff]
    %v170 = vld [vmem:[#allocation2 + $0x310] sm:$0xff]
    %v171 = vld [vmem:[#allocation2 + $0x318] sm:$0xff]
    %v172 = vld [vmem:[#allocation2 + $0x320] sm:$0xff]
    %v173 = vld [vmem:[#allocation2 + $0x328] sm:$0xff]
    %v174 = vld [vmem:[#allocation2 + $0x330] sm:$0xff]
    %v175 = vld [vmem:[#allocation2 + $0x338] sm:$0xff]
    %v176 = vld [vmem:[#allocation2 + $0x340] sm:$0xff]
    %v177 = vld [vmem:[#allocation2 + $0x348] sm:$0xff]
    %v178 = vld [vmem:[#allocation2 + $0x350] sm:$0xff]
    %v179 = vld [vmem:[#allocation2 + $0x358] sm:$0xff]
    %v180 = vld [vmem:[#allocation2 + $0x360] sm:$0xff]
    %v181 = vld [vmem:[#allocation2 + $0x368] sm:$0xff]
    %v182 = vld [vmem:[#allocation2 + $0x370] sm:$0xff]
    %v183 = vld [vmem:[#allocation2 + $0x378] sm:$0xff]
    %v184 = vld [vmem:[#allocation2 + $0x380] sm:$0xff]
    %v185 = vld [vmem:[#allocation2 + $0x388] sm:$0xff]
    %v186 = vld [vmem:[#allocation2 + $0x390] sm:$0xff]
    %v187 = vld [vmem:[#allocation2 + $0x398] sm:$0xff]
    %v188 = vld [vmem:[#allocation2 + $0x3a0] sm:$0xff]
    %v189 = vld [vmem:[#allocation2 + $0x3a8] sm:$0xff]
    %v190 = vld [vmem:[#allocation2 + $0x3b0] sm:$0xff]
    %v191 = vld [vmem:[#allocation2 + $0x3b8] sm:$0xff]
    %v192 = vld [vmem:[#allocation2 + $0x3c0] sm:$0xff]
    %v193 = vld [vmem:[#allocation2 + $0x3c8] sm:$0xff]
    %v194 = vld [vmem:[#allocation2 + $0x3d0] sm:$0xff]
    %v195 = vld [vmem:[#allocation2 + $0x3d8] sm:$0xff]
    %v196 = vld [vmem:[#allocation2 + $0x3e0] sm:$0xff]
    %v197 = vld [vmem:[#allocation2 + $0x3e8] sm:$0xff]
    %v198 = vld [vmem:[#allocation2 + $0x3f0] sm:$0xff]
    %v199 = vld [vmem:[#allocation2 + $0x3f8] sm:$0xff]
    %v200 = vld [vmem:[#allocation2 + $0x400] sm:$0xff]
    %v201 = vld [vmem:[#allocation2 + $0x408] sm:$0xff]
    %v202 = vld [vmem:[#allocation2 + $0x410] sm:$0xff]
    %v203 = vld [vmem:[#allocation2 + $0x418] sm:$0xff]
    %v204 = vld [vmem:[#allocation2 + $0x420] sm:$0xff]
    %v205 = vld [vmem:[#allocation2 + $0x428] sm:$0xff]
    %v206 = vld [vmem:[#allocation2 + $0x430] sm:$0xff]
    %v207 = vld [vmem:[#allocation2 + $0x438] sm:$0xff]
    %v208 = vld [vmem:[#allocation2 + $0x440] sm:$0xff]
    %v209 = vld [vmem:[#allocation2 + $0x448] sm:$0xff]
    %v210 = vld [vmem:[#allocation2 + $0x450] sm:$0xff]
    %v211 = vld [vmem:[#allocation2 + $0x458] sm:$0xff]
    %v212 = vld [vmem:[#allocation2 + $0x460] sm:$0xff]
    %v213 = vld [vmem:[#allocation2 + $0x468] sm:$0xff]
    %v214 = vld [vmem:[#allocation2 + $0x470] sm:$0xff]
    %v215 = vld [vmem:[#allocation2 + $0x478] sm:$0xff]
    %v216 = vld [vmem:[#allocation2 + $0x480] sm:$0xff]
    %v217 = vld [vmem:[#allocation2 + $0x488] sm:$0xff]
    %v218 = vld [vmem:[#allocation2 + $0x490] sm:$0xff]
    %v219 = vld [vmem:[#allocation2 + $0x498] sm:$0xff]
    %v220 = vld [vmem:[#allocation2 + $0x4a0] sm:$0xff]
    %v221 = vld [vmem:[#allocation2 + $0x4a8] sm:$0xff]
    %v222 = vld [vmem:[#allocation2 + $0x4b0] sm:$0xff]
    %v223 = vld [vmem:[#allocation2 + $0x4b8] sm:$0xff]
    %v224 = vld [vmem:[#allocation2 + $0x4c0] sm:$0xff]
    %v225 = vld [vmem:[#allocation2 + $0x4c8] sm:$0xff]
    %v226 = vld [vmem:[#allocation2 + $0x4d0] sm:$0xff]
    %v227 = vld [vmem:[#allocation2 + $0x4d8] sm:$0xff]
    %v228 = vld [vmem:[#allocation2 + $0x4e0] sm:$0xff]
    %v229 = vld [vmem:[#allocation2 + $0x4e8] sm:$0xff]
    %v230 = vld [vmem:[#allocation2 + $0x4f0] sm:$0xff]
    %v231 = vld [vmem:[#allocation2 + $0x4f8] sm:$0xff]
    %v232 = vld [vmem:[#allocation2 + $0x500] sm:$0xff]
    %v233 = vld [vmem:[#allocation2 + $0x508] sm:$0xff]
    %v234 = vld [vmem:[#allocation2 + $0x510] sm:$0xff]
    %v235 = vld [vmem:[#allocation2 + $0x518] sm:$0xff]
    %v236 = vld [vmem:[#allocation2 + $0x520] sm:$0xff]
    %v237 = vld [vmem:[#allocation2 + $0x528] sm:$0xff]
    %v238 = vld [vmem:[#allocation2 + $0x530] sm:$0xff]
    %v239 = vld [vmem:[#allocation2 + $0x538] sm:$0xff]
    %v240 = vld [vmem:[#allocation2 + $0x540] sm:$0xff]
    %v241 = vld [vmem:[#allocation2 + $0x548] sm:$0xff]
    %v242 = vld [vmem:[#allocation2 + $0x550] sm:$0xff]
    %v243 = vld [vmem:[#allocation2 + $0x558] sm:$0xff]
    %v244 = vld [vmem:[#allocation2 + $0x560] sm:$0xff]
    %v245 = vld [vmem:[#allocation2 + $0x568] sm:$0xff]
    %v246 = vld [vmem:[#allocation2 + $0x570] sm:$0xff]
    %v247 = vld [vmem:[#allocation2 + $0x578] sm:$0xff]
    %v248 = vld [vmem:[#allocation2 + $0x580] sm:$0xff]
    %v249 = vld [vmem:[#allocation2 + $0x588] sm:$0xff]
    %v250 = vld [vmem:[#allocation2 + $0x590] sm:$0xff]
    %v251 = vld [vmem:[#allocation2 + $0x598] sm:$0xff]
    %v252 = vld [vmem:[#allocation2 + $0x5a0] sm:$0xff]
    %v253 = vld [vmem:[#allocation2 + $0x5a8] sm:$0xff]
    %v254 = vld [vmem:[#allocation2 + $0x5b0] sm:$0xff]
    %v255 = vld [vmem:[#allocation2 + $0x5b8] sm:$0xff]
    %v256 = vld [vmem:[#allocation2 + $0x5c0] sm:$0xff]
    %v257 = vld [vmem:[#allocation2 + $0x5c8] sm:$0xff]
    %v258 = vld [vmem:[#allocation2 + $0x5d0] sm:$0xff]
    %v259 = vld [vmem:[#allocation2 + $0x5d8] sm:$0xff]
    %v260 = vld [vmem:[#allocation2 + $0x5e0] sm:$0xff]
    %v261 = vld [vmem:[#allocation2 + $0x5e8] sm:$0xff]
    %v262 = vld [vmem:[#allocation2 + $0x5f0] sm:$0xff]
    %v263 = vld [vmem:[#allocation2 + $0x5f8] sm:$0xff]
    %v264 = vld [vmem:[#allocation2 + $0x600] sm:$0xff]
    %v265 = vld [vmem:[#allocation2 + $0x608] sm:$0xff]
    %v266 = vld [vmem:[#allocation2 + $0x610] sm:$0xff]
    %v267 = vld [vmem:[#allocation2 + $0x618] sm:$0xff]
    %v268 = vld [vmem:[#allocation2 + $0x620] sm:$0xff]
    %v269 = vld [vmem:[#allocation2 + $0x628] sm:$0xff]
    %v270 = vld [vmem:[#allocation2 + $0x630] sm:$0xff]
    %v271 = vld [vmem:[#allocation2 + $0x638] sm:$0xff]
    %v272 = vld [vmem:[#allocation2 + $0x640] sm:$0xff]
    %v273 = vld [vmem:[#allocation2 + $0x648] sm:$0xff]
    %v274 = vld [vmem:[#allocation2 + $0x650] sm:$0xff]
    %v275 = vld [vmem:[#allocation2 + $0x658] sm:$0xff]
    %v276 = vld [vmem:[#allocation2 + $0x660] sm:$0xff]
    %v277 = vld [vmem:[#allocation2 + $0x668] sm:$0xff]
    %v278 = vld [vmem:[#allocation2 + $0x670] sm:$0xff]
    %v279 = vld [vmem:[#allocation2 + $0x678] sm:$0xff]
    %v280 = vld [vmem:[#allocation2 + $0x680] sm:$0xff]
    %v281 = vld [vmem:[#allocation2 + $0x688] sm:$0xff]
    %v282 = vld [vmem:[#allocation2 + $0x690] sm:$0xff]
    %v283 = vld [vmem:[#allocation2 + $0x698] sm:$0xff]
    %v284 = vld [vmem:[#allocation2 + $0x6a0] sm:$0xff]
    %v285 = vld [vmem:[#allocation2 + $0x6a8] sm:$0xff]
    %v286 = vld [vmem:[#allocation2 + $0x6b0] sm:$0xff]
    %v287 = vld [vmem:[#allocation2 + $0x6b8] sm:$0xff]
    %v288 = vld [vmem:[#allocation2 + $0x6c0] sm:$0xff]
    %v289 = vld [vmem:[#allocation2 + $0x6c8] sm:$0xff]
    %v290 = vld [vmem:[#allocation2 + $0x6d0] sm:$0xff]
    %v291 = vld [vmem:[#allocation2 + $0x6d8] sm:$0xff]
    %v292 = vld [vmem:[#allocation2 + $0x6e0] sm:$0xff]
    %v293 = vld [vmem:[#allocation2 + $0x6e8] sm:$0xff]
    %v294 = vld [vmem:[#allocation2 + $0x6f0] sm:$0xff]
    %v295 = vld [vmem:[#allocation2 + $0x6f8] sm:$0xff]
    %v296 = vld [vmem:[#allocation2 + $0x700] sm:$0xff]
    %v297 = vld [vmem:[#allocation2 + $0x708] sm:$0xff]
    %v298 = vld [vmem:[#allocation2 + $0x710] sm:$0xff]
    %v299 = vld [vmem:[#allocation2 + $0x718] sm:$0xff]
    %v300 = vld [vmem:[#allocation2 + $0x720] sm:$0xff]
    %v301 = vld [vmem:[#allocation2 + $0x728] sm:$0xff]
    %v302 = vld [vmem:[#allocation2 + $0x730] sm:$0xff]
    %v303 = vld [vmem:[#allocation2 + $0x738] sm:$0xff]
    %v304 = vld [vmem:[#allocation2 + $0x740] sm:$0xff]
    %v305 = vld [vmem:[#allocation2 + $0x748] sm:$0xff]
    %v306 = vld [vmem:[#allocation2 + $0x750] sm:$0xff]
    %v307 = vld [vmem:[#allocation2 + $0x758] sm:$0xff]
    %v308 = vld [vmem:[#allocation2 + $0x760] sm:$0xff]
    %v309 = vld [vmem:[#allocation2 + $0x768] sm:$0xff]
    %v310 = vld [vmem:[#allocation2 + $0x770] sm:$0xff]
    %v311 = vld [vmem:[#allocation2 + $0x778] sm:$0xff]
    %v312 = vld [vmem:[#allocation2 + $0x780] sm:$0xff]
    %v313 = vld [vmem:[#allocation2 + $0x788] sm:$0xff]
    %v314 = vld [vmem:[#allocation2 + $0x790] sm:$0xff]
    %v315 = vld [vmem:[#allocation2 + $0x798] sm:$0xff]
    %v316 = vld [vmem:[#allocation2 + $0x7a0] sm:$0xff]
    %v317 = vld [vmem:[#allocation2 + $0x7a8] sm:$0xff]
    %v318 = vld [vmem:[#allocation2 + $0x7b0] sm:$0xff]
    %v319 = vld [vmem:[#allocation2 + $0x7b8] sm:$0xff]
    %v320 = vld [vmem:[#allocation2 + $0x7c0] sm:$0xff]
    %v321 = vld [vmem:[#allocation2 + $0x7c8] sm:$0xff]
    %v322 = vld [vmem:[#allocation2 + $0x7d0] sm:$0xff]
    %v323 = vld [vmem:[#allocation2 + $0x7d8] sm:$0xff]
    %v324 = vld [vmem:[#allocation2 + $0x7e0] sm:$0xff]
    %v325 = vld [vmem:[#allocation2 + $0x7e8] sm:$0xff]
    %v326 = vld [vmem:[#allocation2 + $0x7f0] sm:$0xff]
    %v327 = vld [vmem:[#allocation2 + $0x7f8] sm:$0xff]
    %v328 = vld [vmem:[#allocation4] sm:$0x3]
    %v330 = vlaneseq
    %v331 = vshrl.u32 %v330, 7
    %v332 = vsub.s32 0, %v331
    %v333 = vrot.slane %v328, %v332
    %v334 = vlaneseq
    %v335 = vshrl.u32 %v334, 7
    %v336 = vsub.s32 1, %v335
    %v337 = vrot.slane %v328, %v336
    %v596 = vunpack.c.l.b16 %v72
    %v597 = vunpack.c.h.b16 %v72
    %v598 = vunpack.c.l.b16 %v73
    %v599 = vunpack.c.h.b16 %v73
    %v600 = vunpack.c.l.b16 %v74
    %v601 = vunpack.c.h.b16 %v74
    %v602 = vunpack.c.l.b16 %v75
    %v603 = vunpack.c.h.b16 %v75
    %v604 = vunpack.c.l.b16 %v76
    %v605 = vunpack.c.h.b16 %v76
    %v606 = vunpack.c.l.b16 %v77
    %v607 = vunpack.c.h.b16 %v77
    %v608 = vunpack.c.l.b16 %v78
    %v609 = vunpack.c.h.b16 %v78
    %v610 = vunpack.c.l.b16 %v79
    %v611 = vunpack.c.h.b16 %v79
    %v612 = vunpack.c.l.b16 %v80
    %v613 = vunpack.c.h.b16 %v80
    %v614 = vunpack.c.l.b16 %v81
    %v615 = vunpack.c.h.b16 %v81
    %v616 = vunpack.c.l.b16 %v82
    %v617 = vunpack.c.h.b16 %v82
    %v618 = vunpack.c.l.b16 %v83
    %v619 = vunpack.c.h.b16 %v83
    %v620 = vunpack.c.l.b16 %v84
    %v621 = vunpack.c.h.b16 %v84
    %v622 = vunpack.c.l.b16 %v85
    %v623 = vunpack.c.h.b16 %v85
    %v624 = vunpack.c.l.b16 %v86
    %v625 = vunpack.c.h.b16 %v86
    %v626 = vunpack.c.l.b16 %v87
    %v627 = vunpack.c.h.b16 %v87
    %v628 = vunpack.c.l.b16 %v88
    %v629 = vunpack.c.h.b16 %v88
    %v630 = vunpack.c.l.b16 %v89
    %v631 = vunpack.c.h.b16 %v89
    %v632 = vunpack.c.l.b16 %v90
    %v633 = vunpack.c.h.b16 %v90
    %v634 = vunpack.c.l.b16 %v91
    %v635 = vunpack.c.h.b16 %v91
    %v636 = vunpack.c.l.b16 %v92
    %v637 = vunpack.c.h.b16 %v92
    %v638 = vunpack.c.l.b16 %v93
    %v639 = vunpack.c.h.b16 %v93
    %v640 = vunpack.c.l.b16 %v94
    %v641 = vunpack.c.h.b16 %v94
    %v642 = vunpack.c.l.b16 %v95
    %v643 = vunpack.c.h.b16 %v95
    %v644 = vunpack.c.l.b16 %v96
    %v645 = vunpack.c.h.b16 %v96
    %v646 = vunpack.c.l.b16 %v97
    %v647 = vunpack.c.h.b16 %v97
    %v648 = vunpack.c.l.b16 %v98
    %v649 = vunpack.c.h.b16 %v98
    %v650 = vunpack.c.l.b16 %v99
    %v651 = vunpack.c.h.b16 %v99
    %v652 = vunpack.c.l.b16 %v100
    %v653 = vunpack.c.h.b16 %v100
    %v654 = vunpack.c.l.b16 %v101
    %v655 = vunpack.c.h.b16 %v101
    %v656 = vunpack.c.l.b16 %v102
    %v657 = vunpack.c.h.b16 %v102
    %v658 = vunpack.c.l.b16 %v103
    %v659 = vunpack.c.h.b16 %v103
    %v660 = vunpack.c.l.b16 %v104
    %v661 = vunpack.c.h.b16 %v104
    %v662 = vunpack.c.l.b16 %v105
    %v663 = vunpack.c.h.b16 %v105
    %v664 = vunpack.c.l.b16 %v106
    %v665 = vunpack.c.h.b16 %v106
    %v666 = vunpack.c.l.b16 %v107
    %v667 = vunpack.c.h.b16 %v107
    %v668 = vunpack.c.l.b16 %v108
    %v669 = vunpack.c.h.b16 %v108
    %v670 = vunpack.c.l.b16 %v109
    %v671 = vunpack.c.h.b16 %v109
    %v672 = vunpack.c.l.b16 %v110
    %v673 = vunpack.c.h.b16 %v110
    %v674 = vunpack.c.l.b16 %v111
    %v675 = vunpack.c.h.b16 %v111
    %v676 = vunpack.c.l.b16 %v112
    %v677 = vunpack.c.h.b16 %v112
    %v678 = vunpack.c.l.b16 %v113
    %v679 = vunpack.c.h.b16 %v113
    %v680 = vunpack.c.l.b16 %v114
    %v681 = vunpack.c.h.b16 %v114
    %v682 = vunpack.c.l.b16 %v115
    %v683 = vunpack.c.h.b16 %v115
    %v684 = vunpack.c.l.b16 %v116
    %v685 = vunpack.c.h.b16 %v116
    %v686 = vunpack.c.l.b16 %v117
    %v687 = vunpack.c.h.b16 %v117
    %v688 = vunpack.c.l.b16 %v118
    %v689 = vunpack.c.h.b16 %v118
    %v690 = vunpack.c.l.b16 %v119
    %v691 = vunpack.c.h.b16 %v119
    %v692 = vunpack.c.l.b16 %v120
    %v693 = vunpack.c.h.b16 %v120
    %v694 = vunpack.c.l.b16 %v121
    %v695 = vunpack.c.h.b16 %v121
    %v696 = vunpack.c.l.b16 %v122
    %v697 = vunpack.c.h.b16 %v122
    %v698 = vunpack.c.l.b16 %v123
    %v699 = vunpack.c.h.b16 %v123
    %v700 = vunpack.c.l.b16 %v124
    %v701 = vunpack.c.h.b16 %v124
    %v702 = vunpack.c.l.b16 %v125
    %v703 = vunpack.c.h.b16 %v125
    %v704 = vunpack.c.l.b16 %v126
    %v705 = vunpack.c.h.b16 %v126
    %v706 = vunpack.c.l.b16 %v127
    %v707 = vunpack.c.h.b16 %v127
    %v708 = vunpack.c.l.b16 %v128
    %v709 = vunpack.c.h.b16 %v128
    %v710 = vunpack.c.l.b16 %v129
    %v711 = vunpack.c.h.b16 %v129
    %v712 = vunpack.c.l.b16 %v130
    %v713 = vunpack.c.h.b16 %v130
    %v714 = vunpack.c.l.b16 %v131
    %v715 = vunpack.c.h.b16 %v131
    %v716 = vunpack.c.l.b16 %v132
    %v717 = vunpack.c.h.b16 %v132
    %v718 = vunpack.c.l.b16 %v133
    %v719 = vunpack.c.h.b16 %v133
    %v720 = vunpack.c.l.b16 %v134
    %v721 = vunpack.c.h.b16 %v134
    %v722 = vunpack.c.l.b16 %v135
    %v723 = vunpack.c.h.b16 %v135
    %v724 = vunpack.c.l.b16 %v136
    %v725 = vunpack.c.h.b16 %v136
    %v726 = vunpack.c.l.b16 %v137
    %v727 = vunpack.c.h.b16 %v137
    %v728 = vunpack.c.l.b16 %v138
    %v729 = vunpack.c.h.b16 %v138
    %v730 = vunpack.c.l.b16 %v139
    %v731 = vunpack.c.h.b16 %v139
    %v732 = vunpack.c.l.b16 %v140
    %v733 = vunpack.c.h.b16 %v140
    %v734 = vunpack.c.l.b16 %v141
    %v735 = vunpack.c.h.b16 %v141
    %v736 = vunpack.c.l.b16 %v142
    %v737 = vunpack.c.h.b16 %v142
    %v738 = vunpack.c.l.b16 %v143
    %v739 = vunpack.c.h.b16 %v143
    %v740 = vunpack.c.l.b16 %v144
    %v741 = vunpack.c.h.b16 %v144
    %v742 = vunpack.c.l.b16 %v145
    %v743 = vunpack.c.h.b16 %v145
    %v744 = vunpack.c.l.b16 %v146
    %v745 = vunpack.c.h.b16 %v146
    %v746 = vunpack.c.l.b16 %v147
    %v747 = vunpack.c.h.b16 %v147
    %v748 = vunpack.c.l.b16 %v148
    %v749 = vunpack.c.h.b16 %v148
    %v750 = vunpack.c.l.b16 %v149
    %v751 = vunpack.c.h.b16 %v149
    %v752 = vunpack.c.l.b16 %v150
    %v753 = vunpack.c.h.b16 %v150
    %v754 = vunpack.c.l.b16 %v151
    %v755 = vunpack.c.h.b16 %v151
    %v756 = vunpack.c.l.b16 %v152
    %v757 = vunpack.c.h.b16 %v152
    %v758 = vunpack.c.l.b16 %v153
    %v759 = vunpack.c.h.b16 %v153
    %v760 = vunpack.c.l.b16 %v154
    %v761 = vunpack.c.h.b16 %v154
    %v762 = vunpack.c.l.b16 %v155
    %v763 = vunpack.c.h.b16 %v155
    %v764 = vunpack.c.l.b16 %v156
    %v765 = vunpack.c.h.b16 %v156
    %v766 = vunpack.c.l.b16 %v157
    %v767 = vunpack.c.h.b16 %v157
    %v768 = vunpack.c.l.b16 %v158
    %v769 = vunpack.c.h.b16 %v158
    %v770 = vunpack.c.l.b16 %v159
    %v771 = vunpack.c.h.b16 %v159
    %v772 = vunpack.c.l.b16 %v160
    %v773 = vunpack.c.h.b16 %v160
    %v774 = vunpack.c.l.b16 %v161
    %v775 = vunpack.c.h.b16 %v161
    %v776 = vunpack.c.l.b16 %v162
    %v777 = vunpack.c.h.b16 %v162
    %v778 = vunpack.c.l.b16 %v163
    %v779 = vunpack.c.h.b16 %v163
    %v780 = vunpack.c.l.b16 %v164
    %v781 = vunpack.c.h.b16 %v164
    %v782 = vunpack.c.l.b16 %v165
    %v783 = vunpack.c.h.b16 %v165
    %v784 = vunpack.c.l.b16 %v166
    %v785 = vunpack.c.h.b16 %v166
    %v786 = vunpack.c.l.b16 %v167
    %v787 = vunpack.c.h.b16 %v167
    %v788 = vunpack.c.l.b16 %v168
    %v789 = vunpack.c.h.b16 %v168
    %v790 = vunpack.c.l.b16 %v169
    %v791 = vunpack.c.h.b16 %v169
    %v792 = vunpack.c.l.b16 %v170
    %v793 = vunpack.c.h.b16 %v170
    %v794 = vunpack.c.l.b16 %v171
    %v795 = vunpack.c.h.b16 %v171
    %v796 = vunpack.c.l.b16 %v172
    %v797 = vunpack.c.h.b16 %v172
    %v798 = vunpack.c.l.b16 %v173
    %v799 = vunpack.c.h.b16 %v173
    %v800 = vunpack.c.l.b16 %v174
    %v801 = vunpack.c.h.b16 %v174
    %v802 = vunpack.c.l.b16 %v175
    %v803 = vunpack.c.h.b16 %v175
    %v804 = vunpack.c.l.b16 %v176
    %v805 = vunpack.c.h.b16 %v176
    %v806 = vunpack.c.l.b16 %v177
    %v807 = vunpack.c.h.b16 %v177
    %v808 = vunpack.c.l.b16 %v178
    %v809 = vunpack.c.h.b16 %v178
    %v810 = vunpack.c.l.b16 %v179
    %v811 = vunpack.c.h.b16 %v179
    %v812 = vunpack.c.l.b16 %v180
    %v813 = vunpack.c.h.b16 %v180
    %v814 = vunpack.c.l.b16 %v181
    %v815 = vunpack.c.h.b16 %v181
    %v816 = vunpack.c.l.b16 %v182
    %v817 = vunpack.c.h.b16 %v182
    %v818 = vunpack.c.l.b16 %v183
    %v819 = vunpack.c.h.b16 %v183
    %v820 = vunpack.c.l.b16 %v184
    %v821 = vunpack.c.h.b16 %v184
    %v822 = vunpack.c.l.b16 %v185
    %v823 = vunpack.c.h.b16 %v185
    %v824 = vunpack.c.l.b16 %v186
    %v825 = vunpack.c.h.b16 %v186
    %v826 = vunpack.c.l.b16 %v187
    %v827 = vunpack.c.h.b16 %v187
    %v828 = vunpack.c.l.b16 %v188
    %v829 = vunpack.c.h.b16 %v188
    %v830 = vunpack.c.l.b16 %v189
    %v831 = vunpack.c.h.b16 %v189
    %v832 = vunpack.c.l.b16 %v190
    %v833 = vunpack.c.h.b16 %v190
    %v834 = vunpack.c.l.b16 %v191
    %v835 = vunpack.c.h.b16 %v191
    %v836 = vunpack.c.l.b16 %v192
    %v837 = vunpack.c.h.b16 %v192
    %v838 = vunpack.c.l.b16 %v193
    %v839 = vunpack.c.h.b16 %v193
    %v840 = vunpack.c.l.b16 %v194
    %v841 = vunpack.c.h.b16 %v194
    %v842 = vunpack.c.l.b16 %v195
    %v843 = vunpack.c.h.b16 %v195
    %v844 = vunpack.c.l.b16 %v196
    %v845 = vunpack.c.h.b16 %v196
    %v846 = vunpack.c.l.b16 %v197
    %v847 = vunpack.c.h.b16 %v197
    %v848 = vunpack.c.l.b16 %v198
    %v849 = vunpack.c.h.b16 %v198
    %v850 = vunpack.c.l.b16 %v199
    %v851 = vunpack.c.h.b16 %v199
    %v852 = vunpack.c.l.b16 %v200
    %v853 = vunpack.c.h.b16 %v200
    %v854 = vunpack.c.l.b16 %v201
    %v855 = vunpack.c.h.b16 %v201
    %v856 = vunpack.c.l.b16 %v202
    %v857 = vunpack.c.h.b16 %v202
    %v858 = vunpack.c.l.b16 %v203
    %v859 = vunpack.c.h.b16 %v203
    %v860 = vunpack.c.l.b16 %v204
    %v861 = vunpack.c.h.b16 %v204
    %v862 = vunpack.c.l.b16 %v205
    %v863 = vunpack.c.h.b16 %v205
    %v864 = vunpack.c.l.b16 %v206
    %v865 = vunpack.c.h.b16 %v206
    %v866 = vunpack.c.l.b16 %v207
    %v867 = vunpack.c.h.b16 %v207
    %v868 = vunpack.c.l.b16 %v208
    %v869 = vunpack.c.h.b16 %v208
    %v870 = vunpack.c.l.b16 %v209
    %v871 = vunpack.c.h.b16 %v209
    %v872 = vunpack.c.l.b16 %v210
    %v873 = vunpack.c.h.b16 %v210
    %v874 = vunpack.c.l.b16 %v211
    %v875 = vunpack.c.h.b16 %v211
    %v876 = vunpack.c.l.b16 %v212
    %v877 = vunpack.c.h.b16 %v212
    %v878 = vunpack.c.l.b16 %v213
    %v879 = vunpack.c.h.b16 %v213
    %v880 = vunpack.c.l.b16 %v214
    %v881 = vunpack.c.h.b16 %v214
    %v882 = vunpack.c.l.b16 %v215
    %v883 = vunpack.c.h.b16 %v215
    %v884 = vunpack.c.l.b16 %v216
    %v885 = vunpack.c.h.b16 %v216
    %v886 = vunpack.c.l.b16 %v217
    %v887 = vunpack.c.h.b16 %v217
    %v888 = vunpack.c.l.b16 %v218
    %v889 = vunpack.c.h.b16 %v218
    %v890 = vunpack.c.l.b16 %v219
    %v891 = vunpack.c.h.b16 %v219
    %v892 = vunpack.c.l.b16 %v220
    %v893 = vunpack.c.h.b16 %v220
    %v894 = vunpack.c.l.b16 %v221
    %v895 = vunpack.c.h.b16 %v221
    %v896 = vunpack.c.l.b16 %v222
    %v897 = vunpack.c.h.b16 %v222
    %v898 = vunpack.c.l.b16 %v223
    %v899 = vunpack.c.h.b16 %v223
    %v900 = vunpack.c.l.b16 %v224
    %v901 = vunpack.c.h.b16 %v224
    %v902 = vunpack.c.l.b16 %v225
    %v903 = vunpack.c.h.b16 %v225
    %v904 = vunpack.c.l.b16 %v226
    %v905 = vunpack.c.h.b16 %v226
    %v906 = vunpack.c.l.b16 %v227
    %v907 = vunpack.c.h.b16 %v227
    %v908 = vunpack.c.l.b16 %v228
    %v909 = vunpack.c.h.b16 %v228
    %v910 = vunpack.c.l.b16 %v229
    %v911 = vunpack.c.h.b16 %v229
    %v912 = vunpack.c.l.b16 %v230
    %v913 = vunpack.c.h.b16 %v230
    %v914 = vunpack.c.l.b16 %v231
    %v915 = vunpack.c.h.b16 %v231
    %v916 = vunpack.c.l.b16 %v232
    %v917 = vunpack.c.h.b16 %v232
    %v918 = vunpack.c.l.b16 %v233
    %v919 = vunpack.c.h.b16 %v233
    %v920 = vunpack.c.l.b16 %v234
    %v921 = vunpack.c.h.b16 %v234
    %v922 = vunpack.c.l.b16 %v235
    %v923 = vunpack.c.h.b16 %v235
    %v924 = vunpack.c.l.b16 %v236
    %v925 = vunpack.c.h.b16 %v236
    %v926 = vunpack.c.l.b16 %v237
    %v927 = vunpack.c.h.b16 %v237
    %v928 = vunpack.c.l.b16 %v238
    %v929 = vunpack.c.h.b16 %v238
    %v930 = vunpack.c.l.b16 %v239
    %v931 = vunpack.c.h.b16 %v239
    %v932 = vunpack.c.l.b16 %v240
    %v933 = vunpack.c.h.b16 %v240
    %v934 = vunpack.c.l.b16 %v241
    %v935 = vunpack.c.h.b16 %v241
    %v936 = vunpack.c.l.b16 %v242
    %v937 = vunpack.c.h.b16 %v242
    %v938 = vunpack.c.l.b16 %v243
    %v939 = vunpack.c.h.b16 %v243
    %v940 = vunpack.c.l.b16 %v244
    %v941 = vunpack.c.h.b16 %v244
    %v942 = vunpack.c.l.b16 %v245
    %v943 = vunpack.c.h.b16 %v245
    %v944 = vunpack.c.l.b16 %v246
    %v945 = vunpack.c.h.b16 %v246
    %v946 = vunpack.c.l.b16 %v247
    %v947 = vunpack.c.h.b16 %v247
    %v948 = vunpack.c.l.b16 %v248
    %v949 = vunpack.c.h.b16 %v248
    %v950 = vunpack.c.l.b16 %v249
    %v951 = vunpack.c.h.b16 %v249
    %v952 = vunpack.c.l.b16 %v250
    %v953 = vunpack.c.h.b16 %v250
    %v954 = vunpack.c.l.b16 %v251
    %v955 = vunpack.c.h.b16 %v251
    %v956 = vunpack.c.l.b16 %v252
    %v957 = vunpack.c.h.b16 %v252
    %v958 = vunpack.c.l.b16 %v253
    %v959 = vunpack.c.h.b16 %v253
    %v960 = vunpack.c.l.b16 %v254
    %v961 = vunpack.c.h.b16 %v254
    %v962 = vunpack.c.l.b16 %v255
    %v963 = vunpack.c.h.b16 %v255
    %v964 = vunpack.c.l.b16 %v256
    %v965 = vunpack.c.h.b16 %v256
    %v966 = vunpack.c.l.b16 %v257
    %v967 = vunpack.c.h.b16 %v257
    %v968 = vunpack.c.l.b16 %v258
    %v969 = vunpack.c.h.b16 %v258
    %v970 = vunpack.c.l.b16 %v259
    %v971 = vunpack.c.h.b16 %v259
    %v972 = vunpack.c.l.b16 %v260
    %v973 = vunpack.c.h.b16 %v260
    %v974 = vunpack.c.l.b16 %v261
    %v975 = vunpack.c.h.b16 %v261
    %v976 = vunpack.c.l.b16 %v262
    %v977 = vunpack.c.h.b16 %v262
    %v978 = vunpack.c.l.b16 %v263
    %v979 = vunpack.c.h.b16 %v263
    %v980 = vunpack.c.l.b16 %v264
    %v981 = vunpack.c.h.b16 %v264
    %v982 = vunpack.c.l.b16 %v265
    %v983 = vunpack.c.h.b16 %v265
    %v984 = vunpack.c.l.b16 %v266
    %v985 = vunpack.c.h.b16 %v266
    %v986 = vunpack.c.l.b16 %v267
    %v987 = vunpack.c.h.b16 %v267
    %v988 = vunpack.c.l.b16 %v268
    %v989 = vunpack.c.h.b16 %v268
    %v990 = vunpack.c.l.b16 %v269
    %v991 = vunpack.c.h.b16 %v269
    %v992 = vunpack.c.l.b16 %v270
    %v993 = vunpack.c.h.b16 %v270
    %v994 = vunpack.c.l.b16 %v271
    %v995 = vunpack.c.h.b16 %v271
    %v996 = vunpack.c.l.b16 %v272
    %v997 = vunpack.c.h.b16 %v272
    %v998 = vunpack.c.l.b16 %v273
    %v999 = vunpack.c.h.b16 %v273
    %v1000 = vunpack.c.l.b16 %v274
    %v1001 = vunpack.c.h.b16 %v274
    %v1002 = vunpack.c.l.b16 %v275
    %v1003 = vunpack.c.h.b16 %v275
    %v1004 = vunpack.c.l.b16 %v276
    %v1005 = vunpack.c.h.b16 %v276
    %v1006 = vunpack.c.l.b16 %v277
    %v1007 = vunpack.c.h.b16 %v277
    %v1008 = vunpack.c.l.b16 %v278
    %v1009 = vunpack.c.h.b16 %v278
    %v1010 = vunpack.c.l.b16 %v279
    %v1011 = vunpack.c.h.b16 %v279
    %v1012 = vunpack.c.l.b16 %v280
    %v1013 = vunpack.c.h.b16 %v280
    %v1014 = vunpack.c.l.b16 %v281
    %v1015 = vunpack.c.h.b16 %v281
    %v1016 = vunpack.c.l.b16 %v282
    %v1017 = vunpack.c.h.b16 %v282
    %v1018 = vunpack.c.l.b16 %v283
    %v1019 = vunpack.c.h.b16 %v283
    %v1020 = vunpack.c.l.b16 %v284
    %v1021 = vunpack.c.h.b16 %v284
    %v1022 = vunpack.c.l.b16 %v285
    %v1023 = vunpack.c.h.b16 %v285
    %v1024 = vunpack.c.l.b16 %v286
    %v1025 = vunpack.c.h.b16 %v286
    %v1026 = vunpack.c.l.b16 %v287
    %v1027 = vunpack.c.h.b16 %v287
    %v1028 = vunpack.c.l.b16 %v288
    %v1029 = vunpack.c.h.b16 %v288
    %v1030 = vunpack.c.l.b16 %v289
    %v1031 = vunpack.c.h.b16 %v289
    %v1032 = vunpack.c.l.b16 %v290
    %v1033 = vunpack.c.h.b16 %v290
    %v1034 = vunpack.c.l.b16 %v291
    %v1035 = vunpack.c.h.b16 %v291
    %v1036 = vunpack.c.l.b16 %v292
    %v1037 = vunpack.c.h.b16 %v292
    %v1038 = vunpack.c.l.b16 %v293
    %v1039 = vunpack.c.h.b16 %v293
    %v1040 = vunpack.c.l.b16 %v294
    %v1041 = vunpack.c.h.b16 %v294
    %v1042 = vunpack.c.l.b16 %v295
    %v1043 = vunpack.c.h.b16 %v295
    %v1044 = vunpack.c.l.b16 %v296
    %v1045 = vunpack.c.h.b16 %v296
    %v1046 = vunpack.c.l.b16 %v297
    %v1047 = vunpack.c.h.b16 %v297
    %v1048 = vunpack.c.l.b16 %v298
    %v1049 = vunpack.c.h.b16 %v298
    %v1050 = vunpack.c.l.b16 %v299
    %v1051 = vunpack.c.h.b16 %v299
    %v1052 = vunpack.c.l.b16 %v300
    %v1053 = vunpack.c.h.b16 %v300
    %v1054 = vunpack.c.l.b16 %v301
    %v1055 = vunpack.c.h.b16 %v301
    %v1056 = vunpack.c.l.b16 %v302
    %v1057 = vunpack.c.h.b16 %v302
    %v1058 = vunpack.c.l.b16 %v303
    %v1059 = vunpack.c.h.b16 %v303
    %v1060 = vunpack.c.l.b16 %v304
    %v1061 = vunpack.c.h.b16 %v304
    %v1062 = vunpack.c.l.b16 %v305
    %v1063 = vunpack.c.h.b16 %v305
    %v1064 = vunpack.c.l.b16 %v306
    %v1065 = vunpack.c.h.b16 %v306
    %v1066 = vunpack.c.l.b16 %v307
    %v1067 = vunpack.c.h.b16 %v307
    %v1068 = vunpack.c.l.b16 %v308
    %v1069 = vunpack.c.h.b16 %v308
    %v1070 = vunpack.c.l.b16 %v309
    %v1071 = vunpack.c.h.b16 %v309
    %v1072 = vunpack.c.l.b16 %v310
    %v1073 = vunpack.c.h.b16 %v310
    %v1074 = vunpack.c.l.b16 %v311
    %v1075 = vunpack.c.h.b16 %v311
    %v1076 = vunpack.c.l.b16 %v312
    %v1077 = vunpack.c.h.b16 %v312
    %v1078 = vunpack.c.l.b16 %v313
    %v1079 = vunpack.c.h.b16 %v313
    %v1080 = vunpack.c.l.b16 %v314
    %v1081 = vunpack.c.h.b16 %v314
    %v1082 = vunpack.c.l.b16 %v315
    %v1083 = vunpack.c.h.b16 %v315
    %v1084 = vunpack.c.l.b16 %v316
    %v1085 = vunpack.c.h.b16 %v316
    %v1086 = vunpack.c.l.b16 %v317
    %v1087 = vunpack.c.h.b16 %v317
    %v1088 = vunpack.c.l.b16 %v318
    %v1089 = vunpack.c.h.b16 %v318
    %v1090 = vunpack.c.l.b16 %v319
    %v1091 = vunpack.c.h.b16 %v319
    %v1092 = vunpack.c.l.b16 %v320
    %v1093 = vunpack.c.h.b16 %v320
    %v1094 = vunpack.c.l.b16 %v321
    %v1095 = vunpack.c.h.b16 %v321
    %v1096 = vunpack.c.l.b16 %v322
    %v1097 = vunpack.c.h.b16 %v322
    %v1098 = vunpack.c.l.b16 %v323
    %v1099 = vunpack.c.h.b16 %v323
    %v1100 = vunpack.c.l.b16 %v324
    %v1101 = vunpack.c.h.b16 %v324
    %v1102 = vunpack.c.l.b16 %v325
    %v1103 = vunpack.c.h.b16 %v325
    %v1104 = vunpack.c.l.b16 %v326
    %v1105 = vunpack.c.h.b16 %v326
    %v1106 = vunpack.c.l.b16 %v327
    %v1107 = vunpack.c.h.b16 %v327
    %v1108 = vpack.c.b16 %v598, %v596
    %v1109 = vpack.c.b16 %v599, %v597
    %v1110 = vpack.c.b16 %v602, %v600
    %v1111 = vpack.c.b16 %v603, %v601
    %v1112 = vpack.c.b16 %v606, %v604
    %v1113 = vpack.c.b16 %v607, %v605
    %v1114 = vpack.c.b16 %v610, %v608
    %v1115 = vpack.c.b16 %v611, %v609
    %v1116 = vpack.c.b16 %v614, %v612
    %v1117 = vpack.c.b16 %v615, %v613
    %v1118 = vpack.c.b16 %v618, %v616
    %v1119 = vpack.c.b16 %v619, %v617
    %v1120 = vpack.c.b16 %v622, %v620
    %v1121 = vpack.c.b16 %v623, %v621
    %v1122 = vpack.c.b16 %v626, %v624
    %v1123 = vpack.c.b16 %v627, %v625
    %v1124 = vpack.c.b16 %v630, %v628
    %v1125 = vpack.c.b16 %v631, %v629
    %v1126 = vpack.c.b16 %v634, %v632
    %v1127 = vpack.c.b16 %v635, %v633
    %v1128 = vpack.c.b16 %v638, %v636
    %v1129 = vpack.c.b16 %v639, %v637
    %v1130 = vpack.c.b16 %v642, %v640
    %v1131 = vpack.c.b16 %v643, %v641
    %v1132 = vpack.c.b16 %v646, %v644
    %v1133 = vpack.c.b16 %v647, %v645
    %v1134 = vpack.c.b16 %v650, %v648
    %v1135 = vpack.c.b16 %v651, %v649
    %v1136 = vpack.c.b16 %v654, %v652
    %v1137 = vpack.c.b16 %v655, %v653
    %v1138 = vpack.c.b16 %v658, %v656
    %v1139 = vpack.c.b16 %v659, %v657
    %v1140 = vpack.c.b16 %v662, %v660
    %v1141 = vpack.c.b16 %v663, %v661
    %v1142 = vpack.c.b16 %v666, %v664
    %v1143 = vpack.c.b16 %v667, %v665
    %v1144 = vpack.c.b16 %v670, %v668
    %v1145 = vpack.c.b16 %v671, %v669
    %v1146 = vpack.c.b16 %v674, %v672
    %v1147 = vpack.c.b16 %v675, %v673
    %v1148 = vpack.c.b16 %v678, %v676
    %v1149 = vpack.c.b16 %v679, %v677
    %v1150 = vpack.c.b16 %v682, %v680
    %v1151 = vpack.c.b16 %v683, %v681
    %v1152 = vpack.c.b16 %v686, %v684
    %v1153 = vpack.c.b16 %v687, %v685
    %v1154 = vpack.c.b16 %v690, %v688
    %v1155 = vpack.c.b16 %v691, %v689
    %v1156 = vpack.c.b16 %v694, %v692
    %v1157 = vpack.c.b16 %v695, %v693
    %v1158 = vpack.c.b16 %v698, %v696
    %v1159 = vpack.c.b16 %v699, %v697
    %v1160 = vpack.c.b16 %v702, %v700
    %v1161 = vpack.c.b16 %v703, %v701
    %v1162 = vpack.c.b16 %v706, %v704
    %v1163 = vpack.c.b16 %v707, %v705
    %v1164 = vpack.c.b16 %v710, %v708
    %v1165 = vpack.c.b16 %v711, %v709
    %v1166 = vpack.c.b16 %v714, %v712
    %v1167 = vpack.c.b16 %v715, %v713
    %v1168 = vpack.c.b16 %v718, %v716
    %v1169 = vpack.c.b16 %v719, %v717
    %v1170 = vpack.c.b16 %v722, %v720
    %v1171 = vpack.c.b16 %v723, %v721
    %v1172 = vpack.c.b16 %v726, %v724
    %v1173 = vpack.c.b16 %v727, %v725
    %v1174 = vpack.c.b16 %v730, %v728
    %v1175 = vpack.c.b16 %v731, %v729
    %v1176 = vpack.c.b16 %v734, %v732
    %v1177 = vpack.c.b16 %v735, %v733
    %v1178 = vpack.c.b16 %v738, %v736
    %v1179 = vpack.c.b16 %v739, %v737
    %v1180 = vpack.c.b16 %v742, %v740
    %v1181 = vpack.c.b16 %v743, %v741
    %v1182 = vpack.c.b16 %v746, %v744
    %v1183 = vpack.c.b16 %v747, %v745
    %v1184 = vpack.c.b16 %v750, %v748
    %v1185 = vpack.c.b16 %v751, %v749
    %v1186 = vpack.c.b16 %v754, %v752
    %v1187 = vpack.c.b16 %v755, %v753
    %v1188 = vpack.c.b16 %v758, %v756
    %v1189 = vpack.c.b16 %v759, %v757
    %v1190 = vpack.c.b16 %v762, %v760
    %v1191 = vpack.c.b16 %v763, %v761
    %v1192 = vpack.c.b16 %v766, %v764
    %v1193 = vpack.c.b16 %v767, %v765
    %v1194 = vpack.c.b16 %v770, %v768
    %v1195 = vpack.c.b16 %v771, %v769
    %v1196 = vpack.c.b16 %v774, %v772
    %v1197 = vpack.c.b16 %v775, %v773
    %v1198 = vpack.c.b16 %v778, %v776
    %v1199 = vpack.c.b16 %v779, %v777
    %v1200 = vpack.c.b16 %v782, %v780
    %v1201 = vpack.c.b16 %v783, %v781
    %v1202 = vpack.c.b16 %v786, %v784
    %v1203 = vpack.c.b16 %v787, %v785
    %v1204 = vpack.c.b16 %v790, %v788
    %v1205 = vpack.c.b16 %v791, %v789
    %v1206 = vpack.c.b16 %v794, %v792
    %v1207 = vpack.c.b16 %v795, %v793
    %v1208 = vpack.c.b16 %v798, %v796
    %v1209 = vpack.c.b16 %v799, %v797
    %v1210 = vpack.c.b16 %v802, %v800
    %v1211 = vpack.c.b16 %v803, %v801
    %v1212 = vpack.c.b16 %v806, %v804
    %v1213 = vpack.c.b16 %v807, %v805
    %v1214 = vpack.c.b16 %v810, %v808
    %v1215 = vpack.c.b16 %v811, %v809
    %v1216 = vpack.c.b16 %v814, %v812
    %v1217 = vpack.c.b16 %v815, %v813
    %v1218 = vpack.c.b16 %v818, %v816
    %v1219 = vpack.c.b16 %v819, %v817
    %v1220 = vpack.c.b16 %v822, %v820
    %v1221 = vpack.c.b16 %v823, %v821
    %v1222 = vpack.c.b16 %v826, %v824
    %v1223 = vpack.c.b16 %v827, %v825
    %v1224 = vpack.c.b16 %v830, %v828
    %v1225 = vpack.c.b16 %v831, %v829
    %v1226 = vpack.c.b16 %v834, %v832
    %v1227 = vpack.c.b16 %v835, %v833
    %v1228 = vpack.c.b16 %v838, %v836
    %v1229 = vpack.c.b16 %v839, %v837
    %v1230 = vpack.c.b16 %v842, %v840
    %v1231 = vpack.c.b16 %v843, %v841
    %v1232 = vpack.c.b16 %v846, %v844
    %v1233 = vpack.c.b16 %v847, %v845
    %v1234 = vpack.c.b16 %v850, %v848
    %v1235 = vpack.c.b16 %v851, %v849
    %v1236 = vpack.c.b16 %v854, %v852
    %v1237 = vpack.c.b16 %v855, %v853
    %v1238 = vpack.c.b16 %v858, %v856
    %v1239 = vpack.c.b16 %v859, %v857
    %v1240 = vpack.c.b16 %v862, %v860
    %v1241 = vpack.c.b16 %v863, %v861
    %v1242 = vpack.c.b16 %v866, %v864
    %v1243 = vpack.c.b16 %v867, %v865
    %v1244 = vpack.c.b16 %v870, %v868
    %v1245 = vpack.c.b16 %v871, %v869
    %v1246 = vpack.c.b16 %v874, %v872
    %v1247 = vpack.c.b16 %v875, %v873
    %v1248 = vpack.c.b16 %v878, %v876
    %v1249 = vpack.c.b16 %v879, %v877
    %v1250 = vpack.c.b16 %v882, %v880
    %v1251 = vpack.c.b16 %v883, %v881
    %v1252 = vpack.c.b16 %v886, %v884
    %v1253 = vpack.c.b16 %v887, %v885
    %v1254 = vpack.c.b16 %v890, %v888
    %v1255 = vpack.c.b16 %v891, %v889
    %v1256 = vpack.c.b16 %v894, %v892
    %v1257 = vpack.c.b16 %v895, %v893
    %v1258 = vpack.c.b16 %v898, %v896
    %v1259 = vpack.c.b16 %v899, %v897
    %v1260 = vpack.c.b16 %v902, %v900
    %v1261 = vpack.c.b16 %v903, %v901
    %v1262 = vpack.c.b16 %v906, %v904
    %v1263 = vpack.c.b16 %v907, %v905
    %v1264 = vpack.c.b16 %v910, %v908
    %v1265 = vpack.c.b16 %v911, %v909
    %v1266 = vpack.c.b16 %v914, %v912
    %v1267 = vpack.c.b16 %v915, %v913
    %v1268 = vpack.c.b16 %v918, %v916
    %v1269 = vpack.c.b16 %v919, %v917
    %v1270 = vpack.c.b16 %v922, %v920
    %v1271 = vpack.c.b16 %v923, %v921
    %v1272 = vpack.c.b16 %v926, %v924
    %v1273 = vpack.c.b16 %v927, %v925
    %v1274 = vpack.c.b16 %v930, %v928
    %v1275 = vpack.c.b16 %v931, %v929
    %v1276 = vpack.c.b16 %v934, %v932
    %v1277 = vpack.c.b16 %v935, %v933
    %v1278 = vpack.c.b16 %v938, %v936
    %v1279 = vpack.c.b16 %v939, %v937
    %v1280 = vpack.c.b16 %v942, %v940
    %v1281 = vpack.c.b16 %v943, %v941
    %v1282 = vpack.c.b16 %v946, %v944
    %v1283 = vpack.c.b16 %v947, %v945
    %v1284 = vpack.c.b16 %v950, %v948
    %v1285 = vpack.c.b16 %v951, %v949
    %v1286 = vpack.c.b16 %v954, %v952
    %v1287 = vpack.c.b16 %v955, %v953
    %v1288 = vpack.c.b16 %v958, %v956
    %v1289 = vpack.c.b16 %v959, %v957
    %v1290 = vpack.c.b16 %v962, %v960
    %v1291 = vpack.c.b16 %v963, %v961
    %v1292 = vpack.c.b16 %v966, %v964
    %v1293 = vpack.c.b16 %v967, %v965
    %v1294 = vpack.c.b16 %v970, %v968
    %v1295 = vpack.c.b16 %v971, %v969
    %v1296 = vpack.c.b16 %v974, %v972
    %v1297 = vpack.c.b16 %v975, %v973
    %v1298 = vpack.c.b16 %v978, %v976
    %v1299 = vpack.c.b16 %v979, %v977
    %v1300 = vpack.c.b16 %v982, %v980
    %v1301 = vpack.c.b16 %v983, %v981
    %v1302 = vpack.c.b16 %v986, %v984
    %v1303 = vpack.c.b16 %v987, %v985
    %v1304 = vpack.c.b16 %v990, %v988
    %v1305 = vpack.c.b16 %v991, %v989
    %v1306 = vpack.c.b16 %v994, %v992
    %v1307 = vpack.c.b16 %v995, %v993
    %v1308 = vpack.c.b16 %v998, %v996
    %v1309 = vpack.c.b16 %v999, %v997
    %v1310 = vpack.c.b16 %v1002, %v1000
    %v1311 = vpack.c.b16 %v1003, %v1001
    %v1312 = vpack.c.b16 %v1006, %v1004
    %v1313 = vpack.c.b16 %v1007, %v1005
    %v1314 = vpack.c.b16 %v1010, %v1008
    %v1315 = vpack.c.b16 %v1011, %v1009
    %v1316 = vpack.c.b16 %v1014, %v1012
    %v1317 = vpack.c.b16 %v1015, %v1013
    %v1318 = vpack.c.b16 %v1018, %v1016
    %v1319 = vpack.c.b16 %v1019, %v1017
    %v1320 = vpack.c.b16 %v1022, %v1020
    %v1321 = vpack.c.b16 %v1023, %v1021
    %v1322 = vpack.c.b16 %v1026, %v1024
    %v1323 = vpack.c.b16 %v1027, %v1025
    %v1324 = vpack.c.b16 %v1030, %v1028
    %v1325 = vpack.c.b16 %v1031, %v1029
    %v1326 = vpack.c.b16 %v1034, %v1032
    %v1327 = vpack.c.b16 %v1035, %v1033
    %v1328 = vpack.c.b16 %v1038, %v1036
    %v1329 = vpack.c.b16 %v1039, %v1037
    %v1330 = vpack.c.b16 %v1042, %v1040
    %v1331 = vpack.c.b16 %v1043, %v1041
    %v1332 = vpack.c.b16 %v1046, %v1044
    %v1333 = vpack.c.b16 %v1047, %v1045
    %v1334 = vpack.c.b16 %v1050, %v1048
    %v1335 = vpack.c.b16 %v1051, %v1049
    %v1336 = vpack.c.b16 %v1054, %v1052
    %v1337 = vpack.c.b16 %v1055, %v1053
    %v1338 = vpack.c.b16 %v1058, %v1056
    %v1339 = vpack.c.b16 %v1059, %v1057
    %v1340 = vpack.c.b16 %v1062, %v1060
    %v1341 = vpack.c.b16 %v1063, %v1061
    %v1342 = vpack.c.b16 %v1066, %v1064
    %v1343 = vpack.c.b16 %v1067, %v1065
    %v1344 = vpack.c.b16 %v1070, %v1068
    %v1345 = vpack.c.b16 %v1071, %v1069
    %v1346 = vpack.c.b16 %v1074, %v1072
    %v1347 = vpack.c.b16 %v1075, %v1073
    %v1348 = vpack.c.b16 %v1078, %v1076
    %v1349 = vpack.c.b16 %v1079, %v1077
    %v1350 = vpack.c.b16 %v1082, %v1080
    %v1351 = vpack.c.b16 %v1083, %v1081
    %v1352 = vpack.c.b16 %v1086, %v1084
    %v1353 = vpack.c.b16 %v1087, %v1085
    %v1354 = vpack.c.b16 %v1090, %v1088
    %v1355 = vpack.c.b16 %v1091, %v1089
    %v1356 = vpack.c.b16 %v1094, %v1092
    %v1357 = vpack.c.b16 %v1095, %v1093
    %v1358 = vpack.c.b16 %v1098, %v1096
    %v1359 = vpack.c.b16 %v1099, %v1097
    %v1360 = vpack.c.b16 %v1102, %v1100
    %v1361 = vpack.c.b16 %v1103, %v1101
    %v1362 = vpack.c.b16 %v1106, %v1104
    %v1363 = vpack.c.b16 %v1107, %v1105
    %1620 = vmatprep.subr.bf16.mxu0 %v1109
    %1621 = vmatpush1.bf16.msra.mxu0 %v1108
    %1622 = vmatprep.subr.bf16.mxu0 %v1111
    %1623 = vmatpush1.bf16.msra.mxu0 %v1110
    %1624 = vmatprep.subr.bf16.mxu0 %v1113
    %1625 = vmatpush1.bf16.msra.mxu0 %v1112
    %1626 = vmatprep.subr.bf16.mxu0 %v1115
    %1627 = vmatpush1.bf16.msra.mxu0 %v1114
    %1628 = vmatprep.subr.bf16.mxu0 %v1117
    %1629 = vmatpush1.bf16.msra.mxu0 %v1116
    %1630 = vmatprep.subr.bf16.mxu0 %v1119
    %1631 = vmatpush1.bf16.msra.mxu0 %v1118
    %1632 = vmatprep.subr.bf16.mxu0 %v1121
    %1633 = vmatpush1.bf16.msra.mxu0 %v1120
    %1634 = vmatprep.subr.bf16.mxu0 %v1123
    %1635 = vmatpush1.bf16.msra.mxu0 %v1122
    %1636 = vmatprep.subr.bf16.mxu0 %v1125
    %1637 = vmatpush1.bf16.msra.mxu0 %v1124
    %1638 = vmatprep.subr.bf16.mxu0 %v1127
    %1639 = vmatpush1.bf16.msra.mxu0 %v1126
    %1640 = vmatprep.subr.bf16.mxu0 %v1129
    %1641 = vmatpush1.bf16.msra.mxu0 %v1128
    %1642 = vmatprep.subr.bf16.mxu0 %v1131
    %1643 = vmatpush1.bf16.msra.mxu0 %v1130
    %1644 = vmatprep.subr.bf16.mxu0 %v1133
    %1645 = vmatpush1.bf16.msra.mxu0 %v1132
    %1646 = vmatprep.subr.bf16.mxu0 %v1135
    %1647 = vmatpush1.bf16.msra.mxu0 %v1134
    %1648 = vmatprep.subr.bf16.mxu0 %v1137
    %1649 = vmatpush1.bf16.msra.mxu0 %v1136
    %1650 = vmatprep.subr.bf16.mxu0 %v1139
    %1651 = vmatpush1.bf16.msra.mxu0 %v1138
    %1652 = vmatprep.mubr.bf16.mxu0 %v57
    %1653 = vmatmul.mubr.bf16.gmra.mrb[0].mxu0 %v56
    %v1654 = vpop.f32.mrb[0].mxu0
    %v1655 = vadd.f32 %v333, %v1654
    %v1656 = vpop.f32.mrb[0].mxu0
    %v1657 = vadd.f32 %v337, %v1656
    %v1658 = vpop.f32.mrb[0].mxu0
    %v1659 = vpop.f32.mrb[0].mxu0
    %1660 = vdwg.mxu0
    %1661 = vmatprep.subr.bf16.mxu0 %v1141
    %1662 = vmatpush1.bf16.msra.mxu0 %v1140
    %1663 = vmatprep.subr.bf16.mxu0 %v1143
    %1664 = vmatpush1.bf16.msra.mxu0 %v1142
    %1665 = vmatprep.subr.bf16.mxu0 %v1145
    %1666 = vmatpush1.bf16.msra.mxu0 %v1144
    %1667 = vmatprep.subr.bf16.mxu0 %v1147
    %1668 = vmatpush1.bf16.msra.mxu0 %v1146
    %1669 = vmatprep.subr.bf16.mxu0 %v1149
    %1670 = vmatpush1.bf16.msra.mxu0 %v1148
    %1671 = vmatprep.subr.bf16.mxu0 %v1151
    %1672 = vmatpush1.bf16.msra.mxu0 %v1150
    %1673 = vmatprep.subr.bf16.mxu0 %v1153
    %1674 = vmatpush1.bf16.msra.mxu0 %v1152
    %1675 = vmatprep.subr.bf16.mxu0 %v1155
    %1676 = vmatpush1.bf16.msra.mxu0 %v1154
    %1677 = vmatprep.subr.bf16.mxu0 %v1157
    %1678 = vmatpush1.bf16.msra.mxu0 %v1156
    %1679 = vmatprep.subr.bf16.mxu0 %v1159
    %1680 = vmatpush1.bf16.msra.mxu0 %v1158
    %1681 = vmatprep.subr.bf16.mxu0 %v1161
    %1682 = vmatpush1.bf16.msra.mxu0 %v1160
    %1683 = vmatprep.subr.bf16.mxu0 %v1163
    %1684 = vmatpush1.bf16.msra.mxu0 %v1162
    %1685 = vmatprep.subr.bf16.mxu0 %v1165
    %1686 = vmatpush1.bf16.msra.mxu0 %v1164
    %1687 = vmatprep.subr.bf16.mxu0 %v1167
    %1688 = vmatpush1.bf16.msra.mxu0 %v1166
    %1689 = vmatprep.subr.bf16.mxu0 %v1169
    %1690 = vmatpush1.bf16.msra.mxu0 %v1168
    %1691 = vmatprep.subr.bf16.mxu0 %v1171
    %1692 = vmatpush1.bf16.msra.mxu0 %v1170
    %1693 = vmatprep.mubr.bf16.mxu0 %v59
    %1694 = vmatmul.mubr.bf16.gmra.mrb[0].mxu0 %v58
    %v1695 = vpop.f32.mrb[0].mxu0
    %v1696 = vadd.f32 %v1655, %v1695
    %v1697 = vpop.f32.mrb[0].mxu0
    %v1698 = vadd.f32 %v1657, %v1697
    %v1699 = vpop.f32.mrb[0].mxu0
    %v1700 = vpop.f32.mrb[0].mxu0
    %1701 = vdwg.mxu0
    %1702 = vmatprep.subr.bf16.mxu0 %v1173
    %1703 = vmatpush1.bf16.msra.mxu0 %v1172
    %1704 = vmatprep.subr.bf16.mxu0 %v1175
    %1705 = vmatpush1.bf16.msra.mxu0 %v1174
    %1706 = vmatprep.subr.bf16.mxu0 %v1177
    %1707 = vmatpush1.bf16.msra.mxu0 %v1176
    %1708 = vmatprep.subr.bf16.mxu0 %v1179
    %1709 = vmatpush1.bf16.msra.mxu0 %v1178
    %1710 = vmatprep.subr.bf16.mxu0 %v1181
    %1711 = vmatpush1.bf16.msra.mxu0 %v1180
    %1712 = vmatprep.subr.bf16.mxu0 %v1183
    %1713 = vmatpush1.bf16.msra.mxu0 %v1182
    %1714 = vmatprep.subr.bf16.mxu0 %v1185
    %1715 = vmatpush1.bf16.msra.mxu0 %v1184
    %1716 = vmatprep.subr.bf16.mxu0 %v1187
    %1717 = vmatpush1.bf16.msra.mxu0 %v1186
    %1718 = vmatprep.subr.bf16.mxu0 %v1189
    %1719 = vmatpush1.bf16.msra.mxu0 %v1188
    %1720 = vmatprep.subr.bf16.mxu0 %v1191
    %1721 = vmatpush1.bf16.msra.mxu0 %v1190
    %1722 = vmatprep.subr.bf16.mxu0 %v1193
    %1723 = vmatpush1.bf16.msra.mxu0 %v1192
    %1724 = vmatprep.subr.bf16.mxu0 %v1195
    %1725 = vmatpush1.bf16.msra.mxu0 %v1194
    %1726 = vmatprep.subr.bf16.mxu0 %v1197
    %1727 = vmatpush1.bf16.msra.mxu0 %v1196
    %1728 = vmatprep.subr.bf16.mxu0 %v1199
    %1729 = vmatpush1.bf16.msra.mxu0 %v1198
    %1730 = vmatprep.subr.bf16.mxu0 %v1201
    %1731 = vmatpush1.bf16.msra.mxu0 %v1200
    %1732 = vmatprep.subr.bf16.mxu0 %v1203
    %1733 = vmatpush1.bf16.msra.mxu0 %v1202
    %1734 = vmatprep.mubr.bf16.mxu0 %v61
    %1735 = vmatmul.mubr.bf16.gmra.mrb[0].mxu0 %v60
    %v1736 = vpop.f32.mrb[0].mxu0
    %v1737 = vadd.f32 %v1696, %v1736
    %v1738 = vpop.f32.mrb[0].mxu0
    %v1739 = vadd.f32 %v1698, %v1738
    %v1740 = vpop.f32.mrb[0].mxu0
    %v1741 = vpop.f32.mrb[0].mxu0
    %1742 = vdwg.mxu0
    %1743 = vmatprep.subr.bf16.mxu0 %v1205
    %1744 = vmatpush1.bf16.msra.mxu0 %v1204
    %1745 = vmatprep.subr.bf16.mxu0 %v1207
    %1746 = vmatpush1.bf16.msra.mxu0 %v1206
    %1747 = vmatprep.subr.bf16.mxu0 %v1209
    %1748 = vmatpush1.bf16.msra.mxu0 %v1208
    %1749 = vmatprep.subr.bf16.mxu0 %v1211
    %1750 = vmatpush1.bf16.msra.mxu0 %v1210
    %1751 = vmatprep.subr.bf16.mxu0 %v1213
    %1752 = vmatpush1.bf16.msra.mxu0 %v1212
    %1753 = vmatprep.subr.bf16.mxu0 %v1215
    %1754 = vmatpush1.bf16.msra.mxu0 %v1214
    %1755 = vmatprep.subr.bf16.mxu0 %v1217
    %1756 = vmatpush1.bf16.msra.mxu0 %v1216
    %1757 = vmatprep.subr.bf16.mxu0 %v1219
    %1758 = vmatpush1.bf16.msra.mxu0 %v1218
    %1759 = vmatprep.subr.bf16.mxu0 %v1221
    %1760 = vmatpush1.bf16.msra.mxu0 %v1220
    %1761 = vmatprep.subr.bf16.mxu0 %v1223
    %1762 = vmatpush1.bf16.msra.mxu0 %v1222
    %1763 = vmatprep.subr.bf16.mxu0 %v1225
    %1764 = vmatpush1.bf16.msra.mxu0 %v1224
    %1765 = vmatprep.subr.bf16.mxu0 %v1227
    %1766 = vmatpush1.bf16.msra.mxu0 %v1226
    %1767 = vmatprep.subr.bf16.mxu0 %v1229
    %1768 = vmatpush1.bf16.msra.mxu0 %v1228
    %1769 = vmatprep.subr.bf16.mxu0 %v1231
    %1770 = vmatpush1.bf16.msra.mxu0 %v1230
    %1771 = vmatprep.subr.bf16.mxu0 %v1233
    %1772 = vmatpush1.bf16.msra.mxu0 %v1232
    %1773 = vmatprep.subr.bf16.mxu0 %v1235
    %1774 = vmatpush1.bf16.msra.mxu0 %v1234
    %1775 = vmatprep.mubr.bf16.mxu0 %v63
    %1776 = vmatmul.mubr.bf16.gmra.mrb[0].mxu0 %v62
    %v1777 = vpop.f32.mrb[0].mxu0
    %v1778 = vadd.f32 %v1737, %v1777
    %v1779 = vpop.f32.mrb[0].mxu0
    %v1780 = vadd.f32 %v1739, %v1779
    %v1781 = vpop.f32.mrb[0].mxu0
    %v1782 = vpop.f32.mrb[0].mxu0
    %1783 = vdwg.mxu0
    %1784 = vmatprep.subr.bf16.mxu0 %v1237
    %1785 = vmatpush1.bf16.msra.mxu0 %v1236
    %1786 = vmatprep.subr.bf16.mxu0 %v1239
    %1787 = vmatpush1.bf16.msra.mxu0 %v1238
    %1788 = vmatprep.subr.bf16.mxu0 %v1241
    %1789 = vmatpush1.bf16.msra.mxu0 %v1240
    %1790 = vmatprep.subr.bf16.mxu0 %v1243
    %1791 = vmatpush1.bf16.msra.mxu0 %v1242
    %1792 = vmatprep.subr.bf16.mxu0 %v1245
    %1793 = vmatpush1.bf16.msra.mxu0 %v1244
    %1794 = vmatprep.subr.bf16.mxu0 %v1247
    %1795 = vmatpush1.bf16.msra.mxu0 %v1246
    %1796 = vmatprep.subr.bf16.mxu0 %v1249
    %1797 = vmatpush1.bf16.msra.mxu0 %v1248
    %1798 = vmatprep.subr.bf16.mxu0 %v1251
    %1799 = vmatpush1.bf16.msra.mxu0 %v1250
    %1800 = vmatprep.subr.bf16.mxu0 %v1253
    %1801 = vmatpush1.bf16.msra.mxu0 %v1252
    %1802 = vmatprep.subr.bf16.mxu0 %v1255
    %1803 = vmatpush1.bf16.msra.mxu0 %v1254
    %1804 = vmatprep.subr.bf16.mxu0 %v1257
    %1805 = vmatpush1.bf16.msra.mxu0 %v1256
    %1806 = vmatprep.subr.bf16.mxu0 %v1259
    %1807 = vmatpush1.bf16.msra.mxu0 %v1258
    %1808 = vmatprep.subr.bf16.mxu0 %v1261
    %1809 = vmatpush1.bf16.msra.mxu0 %v1260
    %1810 = vmatprep.subr.bf16.mxu0 %v1263
    %1811 = vmatpush1.bf16.msra.mxu0 %v1262
    %1812 = vmatprep.subr.bf16.mxu0 %v1265
    %1813 = vmatpush1.bf16.msra.mxu0 %v1264
    %1814 = vmatprep.subr.bf16.mxu0 %v1267
    %1815 = vmatpush1.bf16.msra.mxu0 %v1266
    %1816 = vmatprep.mubr.bf16.mxu0 %v65
    %1817 = vmatmul.mubr.bf16.gmra.mrb[0].mxu0 %v64
    %v1818 = vpop.f32.mrb[0].mxu0
    %v1819 = vadd.f32 %v1778, %v1818
    %v1820 = vpop.f32.mrb[0].mxu0
    %v1821 = vadd.f32 %v1780, %v1820
    %v1822 = vpop.f32.mrb[0].mxu0
    %v1823 = vpop.f32.mrb[0].mxu0
    %1824 = vdwg.mxu0
    %1825 = vmatprep.subr.bf16.mxu0 %v1269
    %1826 = vmatpush1.bf16.msra.mxu0 %v1268
    %1827 = vmatprep.subr.bf16.mxu0 %v1271
    %1828 = vmatpush1.bf16.msra.mxu0 %v1270
    %1829 = vmatprep.subr.bf16.mxu0 %v1273
    %1830 = vmatpush1.bf16.msra.mxu0 %v1272
    %1831 = vmatprep.subr.bf16.mxu0 %v1275
    %1832 = vmatpush1.bf16.msra.mxu0 %v1274
    %1833 = vmatprep.subr.bf16.mxu0 %v1277
    %1834 = vmatpush1.bf16.msra.mxu0 %v1276
    %1835 = vmatprep.subr.bf16.mxu0 %v1279
    %1836 = vmatpush1.bf16.msra.mxu0 %v1278
    %1837 = vmatprep.subr.bf16.mxu0 %v1281
    %1838 = vmatpush1.bf16.msra.mxu0 %v1280
    %1839 = vmatprep.subr.bf16.mxu0 %v1283
    %1840 = vmatpush1.bf16.msra.mxu0 %v1282
    %1841 = vmatprep.subr.bf16.mxu0 %v1285
    %1842 = vmatpush1.bf16.msra.mxu0 %v1284
    %1843 = vmatprep.subr.bf16.mxu0 %v1287
    %1844 = vmatpush1.bf16.msra.mxu0 %v1286
    %1845 = vmatprep.subr.bf16.mxu0 %v1289
    %1846 = vmatpush1.bf16.msra.mxu0 %v1288
    %1847 = vmatprep.subr.bf16.mxu0 %v1291
    %1848 = vmatpush1.bf16.msra.mxu0 %v1290
    %1849 = vmatprep.subr.bf16.mxu0 %v1293
    %1850 = vmatpush1.bf16.msra.mxu0 %v1292
    %1851 = vmatprep.subr.bf16.mxu0 %v1295
    %1852 = vmatpush1.bf16.msra.mxu0 %v1294
    %1853 = vmatprep.subr.bf16.mxu0 %v1297
    %1854 = vmatpush1.bf16.msra.mxu0 %v1296
    %1855 = vmatprep.subr.bf16.mxu0 %v1299
    %1856 = vmatpush1.bf16.msra.mxu0 %v1298
    %1857 = vmatprep.mubr.bf16.mxu0 %v67
    %1858 = vmatmul.mubr.bf16.gmra.mrb[0].mxu0 %v66
    %v1859 = vpop.f32.mrb[0].mxu0
    %v1860 = vadd.f32 %v1819, %v1859
    %v1861 = vpop.f32.mrb[0].mxu0
    %v1862 = vadd.f32 %v1821, %v1861
    %v1863 = vpop.f32.mrb[0].mxu0
    %v1864 = vpop.f32.mrb[0].mxu0
    %1865 = vdwg.mxu0
    %1866 = vmatprep.subr.bf16.mxu0 %v1301
    %1867 = vmatpush1.bf16.msra.mxu0 %v1300
    %1868 = vmatprep.subr.bf16.mxu0 %v1303
    %1869 = vmatpush1.bf16.msra.mxu0 %v1302
    %1870 = vmatprep.subr.bf16.mxu0 %v1305
    %1871 = vmatpush1.bf16.msra.mxu0 %v1304
    %1872 = vmatprep.subr.bf16.mxu0 %v1307
    %1873 = vmatpush1.bf16.msra.mxu0 %v1306
    %1874 = vmatprep.subr.bf16.mxu0 %v1309
    %1875 = vmatpush1.bf16.msra.mxu0 %v1308
    %1876 = vmatprep.subr.bf16.mxu0 %v1311
    %1877 = vmatpush1.bf16.msra.mxu0 %v1310
    %1878 = vmatprep.subr.bf16.mxu0 %v1313
    %1879 = vmatpush1.bf16.msra.mxu0 %v1312
    %1880 = vmatprep.subr.bf16.mxu0 %v1315
    %1881 = vmatpush1.bf16.msra.mxu0 %v1314
    %1882 = vmatprep.subr.bf16.mxu0 %v1317
    %1883 = vmatpush1.bf16.msra.mxu0 %v1316
    %1884 = vmatprep.subr.bf16.mxu0 %v1319
    %1885 = vmatpush1.bf16.msra.mxu0 %v1318
    %1886 = vmatprep.subr.bf16.mxu0 %v1321
    %1887 = vmatpush1.bf16.msra.mxu0 %v1320
    %1888 = vmatprep.subr.bf16.mxu0 %v1323
    %1889 = vmatpush1.bf16.msra.mxu0 %v1322
    %1890 = vmatprep.subr.bf16.mxu0 %v1325
    %1891 = vmatpush1.bf16.msra.mxu0 %v1324
    %1892 = vmatprep.subr.bf16.mxu0 %v1327
    %1893 = vmatpush1.bf16.msra.mxu0 %v1326
    %1894 = vmatprep.subr.bf16.mxu0 %v1329
    %1895 = vmatpush1.bf16.msra.mxu0 %v1328
    %1896 = vmatprep.subr.bf16.mxu0 %v1331
    %1897 = vmatpush1.bf16.msra.mxu0 %v1330
    %1898 = vmatprep.mubr.bf16.mxu0 %v69
    %1899 = vmatmul.mubr.bf16.gmra.mrb[0].mxu0 %v68
    %v1900 = vpop.f32.mrb[0].mxu0
    %v1901 = vadd.f32 %v1860, %v1900
    %v1902 = vpop.f32.mrb[0].mxu0
    %v1903 = vadd.f32 %v1862, %v1902
    %v1904 = vpop.f32.mrb[0].mxu0
    %v1905 = vpop.f32.mrb[0].mxu0
    %1906 = vdwg.mxu0
    %1907 = vmatprep.subr.bf16.mxu0 %v1333
    %1908 = vmatpush1.bf16.msra.mxu0 %v1332
    %1909 = vmatprep.subr.bf16.mxu0 %v1335
    %1910 = vmatpush1.bf16.msra.mxu0 %v1334
    %1911 = vmatprep.subr.bf16.mxu0 %v1337
    %1912 = vmatpush1.bf16.msra.mxu0 %v1336
    %1913 = vmatprep.subr.bf16.mxu0 %v1339
    %1914 = vmatpush1.bf16.msra.mxu0 %v1338
    %1915 = vmatprep.subr.bf16.mxu0 %v1341
    %1916 = vmatpush1.bf16.msra.mxu0 %v1340
    %1917 = vmatprep.subr.bf16.mxu0 %v1343
    %1918 = vmatpush1.bf16.msra.mxu0 %v1342
    %1919 = vmatprep.subr.bf16.mxu0 %v1345
    %1920 = vmatpush1.bf16.msra.mxu0 %v1344
    %1921 = vmatprep.subr.bf16.mxu0 %v1347
    %1922 = vmatpush1.bf16.msra.mxu0 %v1346
    %1923 = vmatprep.subr.bf16.mxu0 %v1349
    %1924 = vmatpush1.bf16.msra.mxu0 %v1348
    %1925 = vmatprep.subr.bf16.mxu0 %v1351
    %1926 = vmatpush1.bf16.msra.mxu0 %v1350
    %1927 = vmatprep.subr.bf16.mxu0 %v1353
    %1928 = vmatpush1.bf16.msra.mxu0 %v1352
    %1929 = vmatprep.subr.bf16.mxu0 %v1355
    %1930 = vmatpush1.bf16.msra.mxu0 %v1354
    %1931 = vmatprep.subr.bf16.mxu0 %v1357
    %1932 = vmatpush1.bf16.msra.mxu0 %v1356
    %1933 = vmatprep.subr.bf16.mxu0 %v1359
    %1934 = vmatpush1.bf16.msra.mxu0 %v1358
    %1935 = vmatprep.subr.bf16.mxu0 %v1361
    %1936 = vmatpush1.bf16.msra.mxu0 %v1360
    %1937 = vmatprep.subr.bf16.mxu0 %v1363
    %1938 = vmatpush1.bf16.msra.mxu0 %v1362
    %1939 = vmatprep.mubr.bf16.mxu0 %v71
    %1940 = vmatmul.mubr.bf16.gmra.mrb[0].mxu0 %v70
    %v1941 = vpop.f32.mrb[0].mxu0
    %v1942 = vadd.f32 %v1901, %v1941
    %v1943 = vpop.f32.mrb[0].mxu0
    %v1944 = vadd.f32 %v1903, %v1943
    %v1945 = vpop.f32.mrb[0].mxu0
    %v1946 = vpop.f32.mrb[0].mxu0
    %1947 = vdwg.mxu0
    %1948 = vst [vmem:[%s3] sm:$0xff] %v1942
    %1949 = vst [vmem:[%s3 + $0x8] sm:$0xff] %v1944
    // Predicated region
    $region22: #{regressor_forward.1} parent=1 // pred_check
      _
    $region23: #{regressor_forward.1} parent=1 // pred_check_branch
      %1951 = sbr.rel (0) target = $region25
    $region24: #{regressor_forward.1} parent=1 // pred_region
      _
    $region25: #{regressor_forward.1} parent=1 // pred_fallthru
      _
    // Predicated region
    $region26: #{regressor_forward.1} parent=1 // pred_check
      _
    $region27: #{regressor_forward.1} parent=1 // pred_check_branch
      %1953 = sbr.rel (0) target = $region29
    $region28: #{regressor_forward.1} parent=1 // pred_region
      _
    $region29: #{regressor_forward.1} parent=1 // pred_fallthru
      _
    %1954 = vsyncpa [#allocation3], 1
    %1955 = vsyncpa [#allocation5], 1

</llo_original>
